<compile_context>
chip_gen: v7x
topology: tpu7x:2x2x1
jax: 0.10.0
libtpu: 0.0.40
codegen_flags: <defaults>
</compile_context>

<pallas_src>
import functools

import jax
import jax.numpy as jnp
from jax.experimental import pallas as pl
from jax.experimental.pallas import tpu as pltpu


LANE = 128   # lane width; H is zero-padded to a multiple of this, output chunks are 128 lanes


def _round_up(n, m):
    return (n + m - 1) // m * m


def _pick_tile(n_pad, candidates=(512, 256, 128)):
    """Largest tile from `candidates` that divides n_pad (n_pad is a multiple of 128)."""
    for c in candidates:
        if n_pad % c == 0:
            return c
    return n_pad


def _vmem_limit_bytes():
    """Generation-aware VMEM limit: ~half of physical VMEM, clamped to [24, 64] MiB.
    v5e/v6e (128 MiB) -> 64 MiB, v7x (64 MiB) -> 32 MiB."""
    try:
        cap = pltpu.get_tpu_info().vmem_capacity_bytes
    except Exception:
        cap = 128 * 1024 * 1024
    return int(min(max(cap // 2, 24 * 1024 * 1024), 64 * 1024 * 1024))


# --------------------------------------------------------------------------- #
# Phase 1: node encoder + fused edge projections
# --------------------------------------------------------------------------- #
def _node_encoder_kernel(x_ref, w1_ref, b1_ref, w2_ref, b2_ref, wab_ref, be_ref,
                         a_ref, b_ref, acc_ref, *, batch_size):
    bb = pl.program_id(1)                                  # batch axis (inner, reduction)

    @pl.when(bb == 0)
    def _():
        acc_ref[...] = jnp.zeros_like(acc_ref)

    x = x_ref[...]                                         # [TB, NT]
    tb, nt = x.shape
    h_pad = w2_ref.shape[0]

    w1 = w1_ref[...][0]                                    # [H_pad]
    b1 = b1_ref[...][0]                                    # [H_pad]
    # Linear(1, H) + ReLU, broadcast over the hidden (lane) axis.
    h1 = jnp.maximum(x[:, :, None] * w1[None, None, :] + b1[None, None, :], 0.0)

    # Linear(H, H) + ReLU on the MXU.
    h2 = jnp.maximum(
        jnp.dot(h1.reshape(tb * nt, h_pad), w2_ref[...],
                preferred_element_type=jnp.float32) + b2_ref[...],
        0.0,
    ).reshape(tb, nt, h_pad)

    # Mask padded batch rows out of the mean, accumulate the batch sum.
    row_ids = bb * tb + jax.lax.broadcasted_iota(jnp.int32, (tb, 1, 1), 0)
    valid = (row_ids < batch_size).astype(h2.dtype)        # [TB, 1, 1]
    acc_ref[...] += jnp.sum(h2 * valid, axis=0)            # [NT, H_pad]

    @pl.when(bb == pl.num_programs(1) - 1)
    def _():
        node_feat = acc_ref[...] * (1.0 / batch_size)      # [NT, H_pad]
        # Fused edge projections: [Wea | Web] in a single MXU matmul.
        ab = jnp.dot(node_feat, wab_ref[...], preferred_element_type=jnp.float32)
        a_ref[...] = ab[:, :h_pad] + be_ref[...]           # be folded into the i side
        b_ref[...] = ab[:, h_pad:]


# --------------------------------------------------------------------------- #
# Phase 2: tiled edge scorer — loops over the REAL hidden size only
# --------------------------------------------------------------------------- #
def _edge_scorer_kernel(a_ref, bT_ref, wo_ref, bo_ref, out_ref, *, hidden):
    i = pl.program_id(0)
    j = pl.program_id(1)
    ti = a_ref.shape[0]                                    # 128 output rows
    tj = out_ref.shape[1]                                  # 128..512 output cols

    a = a_ref[...]                                         # [TI, H_pad]  (has +be folded in)
    bo = bo_ref[0, 0]                                      # scalar bias from SMEM

    for jj in range(tj // LANE):                           # 128-lane output chunks
        c0 = jj * LANE
        acc = jnp.full((ti, LANE), bo, dtype=jnp.float32)  # register-resident accumulator
        # Reduce over the real hidden size: no padded lanes, no XLU lane-reduce,
        # no [TI, TJ, H_pad] intermediate.
        for h in range(hidden):
            a_col = a[:, h:h + 1]                          # [TI, 1]  -> lane broadcast
            b_row = bT_ref[h, c0:c0 + LANE][None, :]       # [1, LANE] -> sublane broadcast
            acc = acc + jnp.maximum(a_col + b_row, 0.0) * wo_ref[h]
        probs = jax.nn.sigmoid(acc)

        # Zero the diagonal with global indices (cost is negligible vs. the H loop).
        rows = i * ti + jax.lax.broadcasted_iota(jnp.int32, (ti, LANE), 0)
        cols = j * tj + c0 + jax.lax.broadcasted_iota(jnp.int32, (ti, LANE), 1)
        out_ref[:, c0:c0 + LANE] = jnp.where(rows == cols, 0.0, probs)


# --------------------------------------------------------------------------- #
# Wrapper
# --------------------------------------------------------------------------- #
def _pad2d(a, rows, cols):
    return jnp.pad(a, ((0, rows - a.shape[0]), (0, cols - a.shape[1])))


def graph_encoder_forward(x, params):
    """x: [B, N] f32 -> edge_probs: [N, N] f32 with zero diagonal."""
    if x.ndim == 1:
        x = x[None, :]
    batch, n_vars = x.shape
    hidden = params["w2"].shape[0]

    h_pad = _round_up(hidden, LANE)
    n_pad = _round_up(max(n_vars, LANE), LANE)
    n_tile = _pick_tile(n_pad)                 # phase-1 N tile and phase-2 j tile
    ti, tj = LANE, n_tile
    # Larger batch tiles amortize per-step overhead; keep intermediates bounded at NT=512.
    batch_tile = 8 if n_tile >= 512 else min(32, _round_up(batch, 8))
    b_pad = _round_up(batch, batch_tile)
    vmem_limit = _vmem_limit_bytes()

    # Zero-padding H keeps the math exact (padded weight rows/cols contribute 0);
    # padded N rows/cols are cropped at the end, padded B rows are masked in-kernel.
    x_p = _pad2d(x, b_pad, n_pad)
    w1 = _pad2d(params["w1"], 1, h_pad)
    b1 = _pad2d(params["b1"], 1, h_pad)
    w2 = _pad2d(params["w2"], h_pad, h_pad)
    b2 = _pad2d(params["b2"], 1, h_pad)
    wab = jnp.concatenate([_pad2d(params["wea"], h_pad, h_pad),
                           _pad2d(params["web"], h_pad, h_pad)], axis=1)
    be = _pad2d(params["be"], 1, h_pad)
    wo = jnp.pad(params["wo"][0], (0, h_pad - hidden))     # [H_pad], lives in SMEM
    bo = params["bo"]                                       # [1, 1],  lives in SMEM

    # ---- Phase 1: node features + edge projections --------------------------
    node_kernel = functools.partial(_node_encoder_kernel, batch_size=batch)
    a_feat, b_feat = pl.pallas_call(
        node_kernel,
        out_shape=(jax.ShapeDtypeStruct((n_pad, h_pad), jnp.float32),
                   jax.ShapeDtypeStruct((n_pad, h_pad), jnp.float32)),
        grid_spec=pltpu.PrefetchScalarGridSpec(
            num_scalar_prefetch=0,
            grid=(n_pad // n_tile, b_pad // batch_tile),
            in_specs=[
                pl.BlockSpec((batch_tile, n_tile), lambda n, b: (b, n)),     # x
                pl.BlockSpec((1, h_pad), lambda n, b: (0, 0)),               # w1
                pl.BlockSpec((1, h_pad), lambda n, b: (0, 0)),               # b1
                pl.BlockSpec((h_pad, h_pad), lambda n, b: (0, 0)),           # w2
                pl.BlockSpec((1, h_pad), lambda n, b: (0, 0)),               # b2
                pl.BlockSpec((h_pad, 2 * h_pad), lambda n, b: (0, 0)),       # [Wea|Web]
                pl.BlockSpec((1, h_pad), lambda n, b: (0, 0)),               # be
            ],
            out_specs=[
                pl.BlockSpec((n_tile, h_pad), lambda n, b: (n, 0)),          # a = nf@Wea + be
                pl.BlockSpec((n_tile, h_pad), lambda n, b: (n, 0)),          # b = nf@Web
            ],
            scratch_shapes=[pltpu.VMEM((n_tile, h_pad), jnp.float32)],
        ),
        compiler_params=pltpu.CompilerParams(
            dimension_semantics=("parallel", "arbitrary"),   # batch mean is the reduction
            vmem_limit_bytes=vmem_limit,
        ),
    )(x_p, w1, b1, w2, b2, wab, be)

    # Pre-transpose b once so phase 2 reads per-h sublane rows (cheap XLA transpose).
    bT_feat = jnp.transpose(b_feat)                          # [H_pad, N_pad]

    # ---- Phase 2: tiled, pipelined edge scorer -------------------------------
    edge_kernel = functools.partial(_edge_scorer_kernel, hidden=hidden)
    edge = pl.pallas_call(
        edge_kernel,
        out_shape=jax.ShapeDtypeStruct((n_pad, n_pad), jnp.float32),
        grid_spec=pltpu.PrefetchScalarGridSpec(
            num_scalar_prefetch=0,
            grid=(n_pad // ti, n_pad // tj),
            in_specs=[
                pl.BlockSpec((ti, h_pad), lambda i, j: (i, 0)),              # a rows
                pl.BlockSpec((h_pad, tj), lambda i, j: (0, j)),              # bT cols
                pl.BlockSpec(memory_space=pltpu.MemorySpace.SMEM),           # wo [H_pad]
                pl.BlockSpec(memory_space=pltpu.MemorySpace.SMEM),           # bo [1,1]
            ],
            out_specs=pl.BlockSpec((ti, tj), lambda i, j: (i, j)),
        ),
        compiler_params=pltpu.CompilerParams(
            dimension_semantics=("parallel", "parallel"),    # 2-TC split on v7x
            vmem_limit_bytes=vmem_limit,
        ),
    )(a_feat, bT_feat, wo, bo)

    return edge[:n_vars, :n_vars]


# --------------------------------------------------------------------------- #
# Parameter init (matches PyTorch: xavier_uniform weights, zero biases)
# --------------------------------------------------------------------------- #
def xavier_uniform(key, out_features, in_features):
    limit = (6.0 / (in_features + out_features)) ** 0.5
    return jax.random.uniform(key, (out_features, in_features),
                              minval=-limit, maxval=limit, dtype=jnp.float32)


def init_params(key, hidden_dim):
    H = hidden_dim
    k1, k2, k3, k4 = jax.random.split(key, 4)
    # PyTorch Linear weights are [out, in]; stored transposed [in, out] for the kernel.
    w_ne1 = xavier_uniform(k1, H, 1)       # Linear(1, H)
    w_ne2 = xavier_uniform(k2, H, H)       # Linear(H, H)
    w_es1 = xavier_uniform(k3, H, 2 * H)   # Linear(2H, H)
    w_es2 = xavier_uniform(k4, 1, H)       # Linear(H, 1)
    return {
        "w1": w_ne1.T,                           # [1, H]
        "b1": jnp.zeros((1, H), jnp.float32),
        "w2": w_ne2.T,                           # [H, H]
        "b2": jnp.zeros((1, H), jnp.float32),
        "wea": w_es1[:, :H].T,                   # [H, H]  (acts on nf[i])
        "web": w_es1[:, H:].T,                   # [H, H]  (acts on nf[j])
        "be": jnp.zeros((1, H), jnp.float32),
        "wo": w_es2,                             # [1, H]
        "bo": jnp.zeros((1, 1), jnp.float32),
    }


def reference_forward(x, params):
    """Pure-JAX reference mirroring the PyTorch loops (vectorized)."""
    h1 = jnp.maximum(x[:, :, None] * params["w1"][0][None, None, :] + params["b1"][0], 0.0)
    h2 = jnp.maximum(jnp.einsum("bnh,hk->bnk", h1, params["w2"]) + params["b2"][0], 0.0)
    nf = h2.mean(axis=0)                                       # [N, H]
    a = nf @ params["wea"]
    b = nf @ params["web"]
    hidden = jnp.maximum(a[:, None, :] + b[None, :, :] + params["be"][0], 0.0)
    logits = jnp.sum(hidden * params["wo"][0], axis=-1) + params["bo"][0, 0]
    probs = jax.nn.sigmoid(logits)
    n = x.shape[1]
    return probs * (1.0 - jnp.eye(n, dtype=jnp.float32))


if __name__ == "__main__":
    key = jax.random.PRNGKey(0)
    k_x, k_p = jax.random.split(key)

    batch, n_variables, hidden_dim = 8, 8, 32
    x = jax.random.normal(k_x, (batch, n_variables), dtype=jnp.float32)
    params = init_params(k_p, hidden_dim)

    edge_probs = jax.block_until_ready(graph_encoder_forward(x, params))
    ref = reference_forward(x, params)

    assert edge_probs.shape == (n_variables, n_variables)
    assert jnp.allclose(edge_probs, ref, atol=1e-5, rtol=1e-4), \
        float(jnp.max(jnp.abs(edge_probs - ref)))
    assert jnp.allclose(jnp.diag(edge_probs), 0.0)

    print("KERNEL_OK")
</pallas_src>

<mosaic_0001>
module attributes {stable_mosaic.version = 11 : i64} {
  func.func @_node_encoder_kernel(%arg0: i32, %arg1: i32, %arg2: memref<8x128xf32, #tpu.memory_space<vmem>>, %arg3: memref<1x128xf32, #tpu.memory_space<vmem>>, %arg4: memref<1x128xf32, #tpu.memory_space<vmem>>, %arg5: memref<128x128xf32, #tpu.memory_space<vmem>>, %arg6: memref<1x128xf32, #tpu.memory_space<vmem>>, %arg7: memref<128x256xf32, #tpu.memory_space<vmem>>, %arg8: memref<1x128xf32, #tpu.memory_space<vmem>>, %arg9: memref<128x128xf32, #tpu.memory_space<vmem>>, %arg10: memref<128x128xf32, #tpu.memory_space<vmem>>, %arg11: memref<128x128xf32, #tpu.memory_space<vmem>>) attributes {dimension_semantics = [#tpu.dimension_semantics<parallel>, #tpu.dimension_semantics<arbitrary>], iteration_bounds = array<i64: 1, 1>, scalar_prefetch = 0 : i64, scratch_operands = 1 : i64, tpu.core_type = #tpu.core_type<tc>, window_params = [{transform_indices = @transform_0, window_bounds = array<i64: 8, 128>}, {pipeline_mode = #tpu.pipeline_mode<synchronous>, transform_indices = @transform_1, window_bounds = array<i64: 1, 128>}, {pipeline_mode = #tpu.pipeline_mode<synchronous>, transform_indices = @transform_2, window_bounds = array<i64: 1, 128>}, {pipeline_mode = #tpu.pipeline_mode<synchronous>, transform_indices = @transform_3, window_bounds = array<i64: 128, 128>}, {pipeline_mode = #tpu.pipeline_mode<synchronous>, transform_indices = @transform_4, window_bounds = array<i64: 1, 128>}, {pipeline_mode = #tpu.pipeline_mode<synchronous>, transform_indices = @transform_5, window_bounds = array<i64: 128, 256>}, {pipeline_mode = #tpu.pipeline_mode<synchronous>, transform_indices = @transform_6, window_bounds = array<i64: 1, 128>}, {transform_indices = @transform_7, window_bounds = array<i64: 128, 128>}, {transform_indices = @transform_8, window_bounds = array<i64: 128, 128>}]} {
    %c0_i32 = arith.constant 0 : i32
    %0 = arith.cmpi eq, %arg1, %c0_i32 : i32
    %1 = arith.extui %0 : i1 to i32
    %c0_i32_0 = arith.constant 0 : i32
    %2 = arith.cmpi ne, %1, %c0_i32_0 : i32
    scf.if %2 {
      %cst_20 = arith.constant 0.000000e+00 : f32
      %44 = vector.broadcast %cst_20 : f32 to vector<128x128xf32>
      %c0_21 = arith.constant 0 : index
      %c0_22 = arith.constant 0 : index
      %45 = vector.load %arg11[%c0_21, %c0_22] : memref<128x128xf32, #tpu.memory_space<vmem>>, vector<128x128xf32>
      tpu.vector_store %arg11[%c0_21, %c0_22], %44 {strides = array<i32>} : memref<128x128xf32, #tpu.memory_space<vmem>>, vector<128x128xf32>,
    } else {
    }
    %c0 = arith.constant 0 : index
    %c0_1 = arith.constant 0 : index
    %3 = vector.load %arg2[%c0, %c0_1] : memref<8x128xf32, #tpu.memory_space<vmem>>, vector<8x128xf32>
    %c0_2 = arith.constant 0 : index
    %c0_3 = arith.constant 0 : index
    %4 = vector.load %arg3[%c0_2, %c0_3] : memref<1x128xf32, #tpu.memory_space<vmem>>, vector<1x128xf32>
    %5 = vector.shape_cast %4 : vector<1x128xf32> to vector<128xf32>
    %c0_4 = arith.constant 0 : index
    %c0_5 = arith.constant 0 : index
    %6 = vector.load %arg4[%c0_4, %c0_5] : memref<1x128xf32, #tpu.memory_space<vmem>>, vector<1x128xf32>
    %7 = vector.shape_cast %6 : vector<1x128xf32> to vector<128xf32>
    %8 = vector.shape_cast %3 : vector<8x128xf32> to vector<8x128x1xf32>
    %9 = vector.shape_cast %5 : vector<128xf32> to vector<1x1x128xf32>
    %10 = vector.broadcast %8 : vector<8x128x1xf32> to vector<8x128x128xf32>
    %11 = vector.broadcast %9 : vector<1x1x128xf32> to vector<8x128x128xf32>
    %12 = arith.mulf %10, %11 : vector<8x128x128xf32>
    %13 = vector.shape_cast %7 : vector<128xf32> to vector<1x1x128xf32>
    %14 = vector.broadcast %13 : vector<1x1x128xf32> to vector<8x128x128xf32>
    %15 = arith.addf %12, %14 : vector<8x128x128xf32>
    %cst = arith.constant 0.000000e+00 : f32
    %16 = vector.broadcast %cst : f32 to vector<8x128x128xf32>
    %17 = arith.maximumf %15, %16 : vector<8x128x128xf32>
    %18 = vector.shape_cast %17 : vector<8x128x128xf32> to vector<1024x128xf32>
    %c0_6 = arith.constant 0 : index
    %c0_7 = arith.constant 0 : index
    %19 = vector.load %arg5[%c0_6, %c0_7] : memref<128x128xf32, #tpu.memory_space<vmem>>, vector<128x128xf32>
    %cst_8 = arith.constant dense<0.000000e+00> : vector<1024x128xf32>
    %20 = tpu.matmul %18, %19, %cst_8 {dimension_numbers = #tpu.dot_dimension_numbers<[1], [0], [0], [1], [0, 0, 1, 1], [], []>} : vector<1024x128xf32>, vector<128x128xf32>, vector<1024x128xf32> -> vector<1024x128xf32>
    %c0_9 = arith.constant 0 : index
    %c0_10 = arith.constant 0 : index
    %21 = vector.load %arg6[%c0_9, %c0_10] : memref<1x128xf32, #tpu.memory_space<vmem>>, vector<1x128xf32>
    %22 = vector.broadcast %21 : vector<1x128xf32> to vector<1024x128xf32>
    %23 = arith.addf %20, %22 : vector<1024x128xf32>
    %cst_11 = arith.constant 0.000000e+00 : f32
    %24 = vector.broadcast %cst_11 : f32 to vector<1024x128xf32>
    %25 = arith.maximumf %23, %24 : vector<1024x128xf32>
    %26 = vector.shape_cast %25 : vector<1024x128xf32> to vector<8x128x128xf32>
    %c8_i32 = arith.constant 8 : i32
    %27 = arith.muli %arg1, %c8_i32 : i32
    %28 = tpu.iota {dimensions = array<i32: 0>} : vector<8x1x1xi32>
    %29 = vector.broadcast %27 : i32 to vector<8x1x1xi32>
    %30 = arith.addi %29, %28 : vector<8x1x1xi32>
    %c8_i32_12 = arith.constant 8 : i32
    %31 = vector.broadcast %c8_i32_12 : i32 to vector<8x1x1xi32>
    %32 = arith.cmpi slt, %30, %31 : vector<8x1x1xi32>
    %33 = arith.extui %32 : vector<8x1x1xi1> to vector<8x1x1xi32>
    %34 = arith.sitofp %33 : vector<8x1x1xi32> to vector<8x1x1xf32>
    %c0_13 = arith.constant 0 : index
    %c0_14 = arith.constant 0 : index
    %35 = vector.load %arg11[%c0_13, %c0_14] : memref<128x128xf32, #tpu.memory_space<vmem>>, vector<128x128xf32>
    %36 = vector.broadcast %34 : vector<8x1x1xf32> to vector<8x128x128xf32>
    %37 = arith.mulf %26, %36 : vector<8x128x128xf32>
    %cst_15 = arith.constant dense<0.000000e+00> : vector<128x128xf32>
    %38 = vector.multi_reduction <add>, %37, %cst_15 [0] : vector<8x128x128xf32> to vector<128x128xf32>
    %39 = arith.addf %35, %38 : vector<128x128xf32>
    %c0_16 = arith.constant 0 : index
    %c0_17 = arith.constant 0 : index
    %40 = vector.load %arg11[%c0_16, %c0_17] : memref<128x128xf32, #tpu.memory_space<vmem>>, vector<128x128xf32>
    tpu.vector_store %arg11[%c0_16, %c0_17], %39 {strides = array<i32>} : memref<128x128xf32, #tpu.memory_space<vmem>>, vector<128x128xf32>,
    %c0_i32_18 = arith.constant 0 : i32
    %41 = arith.cmpi eq, %arg1, %c0_i32_18 : i32
    %42 = arith.extui %41 : i1 to i32
    %c0_i32_19 = arith.constant 0 : i32
    %43 = arith.cmpi ne, %42, %c0_i32_19 : i32
    scf.if %43 {
      %c0_20 = arith.constant 0 : index
      %c0_21 = arith.constant 0 : index
      %44 = vector.load %arg11[%c0_20, %c0_21] : memref<128x128xf32, #tpu.memory_space<vmem>>, vector<128x128xf32>
      %cst_22 = arith.constant 1.250000e-01 : f32
      %45 = vector.broadcast %cst_22 : f32 to vector<128x128xf32>
      %46 = arith.mulf %44, %45 : vector<128x128xf32>
      %c0_23 = arith.constant 0 : index
      %c0_24 = arith.constant 0 : index
      %47 = vector.load %arg7[%c0_23, %c0_24] : memref<128x256xf32, #tpu.memory_space<vmem>>, vector<128x256xf32>
      %cst_25 = arith.constant dense<0.000000e+00> : vector<128x256xf32>
      %48 = tpu.matmul %46, %47, %cst_25 {dimension_numbers = #tpu.dot_dimension_numbers<[1], [0], [0], [1], [0, 0, 1, 1], [], []>} : vector<128x128xf32>, vector<128x256xf32>, vector<128x256xf32> -> vector<128x256xf32>
      %49 = vector.extract_strided_slice %48 {offsets = [0, 0], sizes = [128, 128], strides = [1, 1]} : vector<128x256xf32> to vector<128x128xf32>
      %c0_26 = arith.constant 0 : index
      %c0_27 = arith.constant 0 : index
      %50 = vector.load %arg8[%c0_26, %c0_27] : memref<1x128xf32, #tpu.memory_space<vmem>>, vector<1x128xf32>
      %51 = vector.broadcast %50 : vector<1x128xf32> to vector<128x128xf32>
      %52 = arith.addf %49, %51 : vector<128x128xf32>
      %c0_28 = arith.constant 0 : index
      %c0_29 = arith.constant 0 : index
      %53 = vector.load %arg9[%c0_28, %c0_29] : memref<128x128xf32, #tpu.memory_space<vmem>>, vector<128x128xf32>
      tpu.vector_store %arg9[%c0_28, %c0_29], %52 {strides = array<i32>} : memref<128x128xf32, #tpu.memory_space<vmem>>, vector<128x128xf32>,
      %54 = vector.extract_strided_slice %48 {offsets = [0, 128], sizes = [128, 128], strides = [1, 1]} : vector<128x256xf32> to vector<128x128xf32>
      %c0_30 = arith.constant 0 : index
      %c0_31 = arith.constant 0 : index
      %55 = vector.load %arg10[%c0_30, %c0_31] : memref<128x128xf32, #tpu.memory_space<vmem>>, vector<128x128xf32>
      tpu.vector_store %arg10[%c0_30, %c0_31], %54 {strides = array<i32>} : memref<128x128xf32, #tpu.memory_space<vmem>>, vector<128x128xf32>,
    } else {
    }
    return
  }
  func.func @transform_0(%arg0: i32, %arg1: i32) -> (i32, i32) {
    %c0_i32 = arith.constant 0 : i32
    return %arg1, %arg0 : i32, i32
  }
  func.func @transform_1(%arg0: i32, %arg1: i32) -> (i32, i32) {
    %c0_i32 = arith.constant 0 : i32
    %c0_i32_0 = arith.constant 0 : i32
    %c0_i32_1 = arith.constant 0 : i32
    return %c0_i32, %c0_i32_0 : i32, i32
  }
  func.func @transform_2(%arg0: i32, %arg1: i32) -> (i32, i32) {
    %c0_i32 = arith.constant 0 : i32
    %c0_i32_0 = arith.constant 0 : i32
    %c0_i32_1 = arith.constant 0 : i32
    return %c0_i32, %c0_i32_0 : i32, i32
  }
  func.func @transform_3(%arg0: i32, %arg1: i32) -> (i32, i32) {
    %c0_i32 = arith.constant 0 : i32
    %c0_i32_0 = arith.constant 0 : i32
    %c0_i32_1 = arith.constant 0 : i32
    return %c0_i32, %c0_i32_0 : i32, i32
  }
  func.func @transform_4(%arg0: i32, %arg1: i32) -> (i32, i32) {
    %c0_i32 = arith.constant 0 : i32
    %c0_i32_0 = arith.constant 0 : i32
    %c0_i32_1 = arith.constant 0 : i32
    return %c0_i32, %c0_i32_0 : i32, i32
  }
  func.func @transform_5(%arg0: i32, %arg1: i32) -> (i32, i32) {
    %c0_i32 = arith.constant 0 : i32
    %c0_i32_0 = arith.constant 0 : i32
    %c0_i32_1 = arith.constant 0 : i32
    return %c0_i32, %c0_i32_0 : i32, i32
  }
  func.func @transform_6(%arg0: i32, %arg1: i32) -> (i32, i32) {
    %c0_i32 = arith.constant 0 : i32
    %c0_i32_0 = arith.constant 0 : i32
    %c0_i32_1 = arith.constant 0 : i32
    return %c0_i32, %c0_i32_0 : i32, i32
  }
  func.func @transform_7(%arg0: i32, %arg1: i32) -> (i32, i32) {
    %c0_i32 = arith.constant 0 : i32
    %c0_i32_0 = arith.constant 0 : i32
    return %arg0, %c0_i32 : i32, i32
  }
  func.func @transform_8(%arg0: i32, %arg1: i32) -> (i32, i32) {
    %c0_i32 = arith.constant 0 : i32
    %c0_i32_0 = arith.constant 0 : i32
    return %arg0, %c0_i32 : i32, i32
  }
}

</mosaic_0001>

<llo_original>
// kernel: tpu_custom_call.1
$region0: #{tpu_custom_call.1}
  #allocation0 [shape = 'u32[]', space=smem, size = 0x4, offset = 0x4, fixed_abs, tag = 'smem constant byte address 0x4 - core index']
  #allocation1 [shape = 'u32[144,128]{1,0:T(1,128)}', space=vmem, size = 0x12000, scoped, tag = 'internal scratch']
  #allocation2 [shape = 'f32[128,128]{1,0:T(8,128)}', space=vmem, size = 0x10000, scoped, tag = 'scratch operand']
  %s0 = inlined_call_operand.hbm [shape: f32[8,128], index: 0, kind: input, shape index: {}]
  %s1 = inlined_call_operand.hbm [shape: f32[1,128], index: 1, kind: input, shape index: {}]
  %s2 = inlined_call_operand.hbm [shape: f32[1,128], index: 2, kind: input, shape index: {}]
  %s3 = inlined_call_operand.hbm [shape: f32[128,128], index: 3, kind: input, shape index: {}]
  %s4 = inlined_call_operand.hbm [shape: f32[1,128], index: 4, kind: input, shape index: {}]
  %s5 = inlined_call_operand.hbm [shape: f32[128,256], index: 5, kind: input, shape index: {}]
  %s6 = inlined_call_operand.hbm [shape: f32[1,128], index: 6, kind: input, shape index: {}]
  %s7 = inlined_call_operand.hbm [shape: f32[128,128], index: 7, kind: output, shape index: {0}]
  %s8 = inlined_call_operand.hbm [shape: f32[128,128], index: 8, kind: output, shape index: {1}]
  %9 = xla_tuple %s7, %s8
  %s10 = sld [smem:[#allocation0]]
  $region82: #{tpu_custom_call.1} parent=0
    _
  %s12 = ssub.s32 1, %s10
  %s13 = scalar_select 0, %s12, %s10
  $region1: #{tpu_custom_call.1} parent=0
    #allocation3 [shape = 'u8[4096]{0}', space=vmem, size = 0x1000, scoped, tag = 'input window, operand 0, single buffered']
    #allocation4 [shape = 's32[1]{0}', space=sflag, size = 0x4, scoped, tag = 'scoped memory for tpu_custom_call.1']
    #allocation5 [shape = 's32[1]{0}', space=sflag, size = 0x4, scoped, tag = 'scoped memory for tpu_custom_call.1']
    #allocation6 [shape = 'u8[512]{0}', space=vmem, size = 0x400, scoped, tag = 'input window, operand 1, single buffered']
    #allocation7 [shape = 's32[1]{0}', space=sflag, size = 0x4, scoped, tag = 'scoped memory for tpu_custom_call.1']
    #allocation8 [shape = 'u8[512]{0}', space=vmem, size = 0x400, scoped, tag = 'input window, operand 2, single buffered']
    #allocation9 [shape = 'u8[65536]{0}', space=vmem, size = 0x10000, scoped, tag = 'input window, operand 3, single buffered']
    #allocation10 [shape = 's32[1]{0}', space=sflag, size = 0x4, scoped, tag = 'scoped memory for tpu_custom_call.1']
    #allocation11 [shape = 'u8[512]{0}', space=vmem, size = 0x400, scoped, tag = 'input window, operand 4, single buffered']
    #allocation12 [shape = 'u8[131072]{0}', space=vmem, size = 0x20000, scoped, tag = 'input window, operand 5, single buffered']
    #allocation13 [shape = 's32[1]{0}', space=sflag, size = 0x4, scoped, tag = 'scoped memory for tpu_custom_call.1']
    #allocation14 [shape = 'u8[512]{0}', space=vmem, size = 0x400, scoped, tag = 'input window, operand 6, single buffered']
    #allocation15 [shape = 'u8[65536]{0}', space=vmem, size = 0x10000, scoped, tag = 'output window, operand 0, single buffered']
    #allocation16 [shape = 'u8[65536]{0}', space=vmem, size = 0x10000, scoped, tag = 'output window, operand 1, single buffered']
    #allocation17 [shape = 's32[1]{0}', space=sflag, size = 0x4, scoped, tag = 'scoped memory for tpu_custom_call.1']
    %14 = vsyncpa [#allocation4], 0
    %15 = vsyncpa [#allocation7], 0
    %16 = vsyncpa [#allocation10], 0
    %17 = vsyncpa [#allocation13], 0
    %18 = vsyncpa [#allocation5], 0
    %19 = vsyncpa [#allocation17], 0
    // Predicated region
    $region2: #{tpu_custom_call.1} parent=1 // pred_check
      _
    $region3: #{tpu_custom_call.1} parent=1 // pred_check_branch
      %21 = sbr.rel (0) target = $region5
    $region4: #{tpu_custom_call.1} parent=1 // pred_region
      %s23 = ssub.s32 128, 128
      %24 = vsyncadd [#allocation4], %s23
      %s26 = sshll.u32 [#allocation3], 4
      %s27 = int_to_ptr.vmem [resolvable:$true] %s26
      %29 = dma.hbm_to_vmem [thread:$0]  %s0, 128, %s27, [#allocation4]
    $region5: #{tpu_custom_call.1} parent=1 // pred_fallthru
      _
    // Predicated region
    $region6: #{tpu_custom_call.1} parent=1 // pred_check
      _
    $region7: #{tpu_custom_call.1} parent=1 // pred_check_branch
      %31 = sbr.rel (0) target = $region9
    $region8: #{tpu_custom_call.1} parent=1 // pred_region
      %s33 = ssub.s32 16, 16
      %34 = vsyncadd [#allocation7], %s33
      %s36 = sshll.u32 [#allocation6], 4
      %s37 = int_to_ptr.vmem [resolvable:$true] %s36
      %39 = dma.hbm_to_vmem [thread:$0]  %s1, 16, %s37, [#allocation7]
    $region9: #{tpu_custom_call.1} parent=1 // pred_fallthru
      _
    // Predicated region
    $region10: #{tpu_custom_call.1} parent=1 // pred_check
      _
    $region11: #{tpu_custom_call.1} parent=1 // pred_check_branch
      %41 = sbr.rel (0) target = $region13
    $region12: #{tpu_custom_call.1} parent=1 // pred_region
      %s43 = ssub.s32 16, 16
      %44 = vsyncadd [#allocation7], %s43
      %s46 = sshll.u32 [#allocation8], 4
      %s47 = int_to_ptr.vmem [resolvable:$true] %s46
      %49 = dma.hbm_to_vmem [thread:$0]  %s2, 16, %s47, [#allocation7]
    $region13: #{tpu_custom_call.1} parent=1 // pred_fallthru
      _
    // Predicated region
    $region14: #{tpu_custom_call.1} parent=1 // pred_check
      _
    $region15: #{tpu_custom_call.1} parent=1 // pred_check_branch
      %51 = sbr.rel (0) target = $region17
    $region16: #{tpu_custom_call.1} parent=1 // pred_region
      %s53 = ssub.s32 2048, 2048
      %54 = vsyncadd [#allocation10], %s53
      %s55 = sshll.u32 [#allocation9], 4
      %s56 = int_to_ptr.vmem [resolvable:$true] %s55
      %61 = dma.hbm_to_vmem [thread:$0]  %s3, 2048, %s56, [#allocation10], 128, 128, 8
    $region17: #{tpu_custom_call.1} parent=1 // pred_fallthru
      _
    // Predicated region
    $region18: #{tpu_custom_call.1} parent=1 // pred_check
      _
    $region19: #{tpu_custom_call.1} parent=1 // pred_check_branch
      %63 = sbr.rel (0) target = $region21
    $region20: #{tpu_custom_call.1} parent=1 // pred_region
      %s65 = ssub.s32 16, 16
      %66 = vsyncadd [#allocation10], %s65
      %s68 = sshll.u32 [#allocation11], 4
      %s69 = int_to_ptr.vmem [resolvable:$true] %s68
      %71 = dma.hbm_to_vmem [thread:$0]  %s4, 16, %s69, [#allocation10]
    $region21: #{tpu_custom_call.1} parent=1 // pred_fallthru
      _
    // Predicated region
    $region22: #{tpu_custom_call.1} parent=1 // pred_check
      _
    $region23: #{tpu_custom_call.1} parent=1 // pred_check_branch
      %73 = sbr.rel (0) target = $region25
    $region24: #{tpu_custom_call.1} parent=1 // pred_region
      %s75 = ssub.s32 4096, 4096
      %76 = vsyncadd [#allocation13], %s75
      %s77 = sshll.u32 [#allocation12], 4
      %s78 = int_to_ptr.vmem [resolvable:$true] %s77
      %83 = dma.hbm_to_vmem [thread:$0]  %s5, 4096, %s78, [#allocation13], 256, 256, 16
    $region25: #{tpu_custom_call.1} parent=1 // pred_fallthru
      _
    // Predicated region
    $region26: #{tpu_custom_call.1} parent=1 // pred_check
      _
    $region27: #{tpu_custom_call.1} parent=1 // pred_check_branch
      %85 = sbr.rel (0) target = $region29
    $region28: #{tpu_custom_call.1} parent=1 // pred_region
      %s87 = ssub.s32 16, 16
      %88 = vsyncadd [#allocation13], %s87
      %s90 = sshll.u32 [#allocation14], 4
      %s91 = int_to_ptr.vmem [resolvable:$true] %s90
      %93 = dma.hbm_to_vmem [thread:$0]  %s6, 16, %s91, [#allocation13]
    $region29: #{tpu_custom_call.1} parent=1 // pred_fallthru
      _
    // Predicated region
    $region30: #{tpu_custom_call.1} parent=1 // pred_check
      _
    $region31: #{tpu_custom_call.1} parent=1 // pred_check_branch
      %95 = sbr.rel (0) target = $region33
    $region32: #{tpu_custom_call.1} parent=1 // pred_region
      %96 = dma.done [#allocation4], 128
    $region33: #{tpu_custom_call.1} parent=1 // pred_fallthru
      _
    // Predicated region
    $region34: #{tpu_custom_call.1} parent=1 // pred_check
      _
    $region35: #{tpu_custom_call.1} parent=1 // pred_check_branch
      %98 = sbr.rel (0) target = $region37
    $region36: #{tpu_custom_call.1} parent=1 // pred_region
      %99 = dma.done [#allocation7], 16
    $region37: #{tpu_custom_call.1} parent=1 // pred_fallthru
      _
    // Predicated region
    $region38: #{tpu_custom_call.1} parent=1 // pred_check
      _
    $region39: #{tpu_custom_call.1} parent=1 // pred_check_branch
      %101 = sbr.rel (0) target = $region41
    $region40: #{tpu_custom_call.1} parent=1 // pred_region
      %102 = dma.done [#allocation7], 16
    $region41: #{tpu_custom_call.1} parent=1 // pred_fallthru
      _
    // Predicated region
    $region42: #{tpu_custom_call.1} parent=1 // pred_check
      _
    $region43: #{tpu_custom_call.1} parent=1 // pred_check_branch
      %104 = sbr.rel (0) target = $region45
    $region44: #{tpu_custom_call.1} parent=1 // pred_region
      %105 = dma.done [#allocation10], 2048
    $region45: #{tpu_custom_call.1} parent=1 // pred_fallthru
      _
    // Predicated region
    $region46: #{tpu_custom_call.1} parent=1 // pred_check
      _
    $region47: #{tpu_custom_call.1} parent=1 // pred_check_branch
      %107 = sbr.rel (0) target = $region49
    $region48: #{tpu_custom_call.1} parent=1 // pred_region
      %108 = dma.done [#allocation10], 16
    $region49: #{tpu_custom_call.1} parent=1 // pred_fallthru
      _
    // Predicated region
    $region50: #{tpu_custom_call.1} parent=1 // pred_check
      _
    $region51: #{tpu_custom_call.1} parent=1 // pred_check_branch
      %110 = sbr.rel (0) target = $region53
    $region52: #{tpu_custom_call.1} parent=1 // pred_region
      %111 = dma.done [#allocation13], 4096
    $region53: #{tpu_custom_call.1} parent=1 // pred_fallthru
      _
    // Predicated region
    $region54: #{tpu_custom_call.1} parent=1 // pred_check
      _
    $region55: #{tpu_custom_call.1} parent=1 // pred_check_branch
      %113 = sbr.rel (0) target = $region57
    $region56: #{tpu_custom_call.1} parent=1 // pred_region
      %114 = dma.done [#allocation13], 16
    $region57: #{tpu_custom_call.1} parent=1 // pred_fallthru
      _
    %p115 = scmp.eq.s32.totalorder 0, 0
    // Predicated region
    $region58: #{tpu_custom_call.1} parent=1 // pred_check
      %p116 = pneg %p115
    $region59: #{tpu_custom_call.1} parent=1 // pred_check_branch
      %118 = sbr.rel (%p116) target = $region61
    $region60: #{tpu_custom_call.1} parent=1 // pred_region
      %119 = vst [vmem:[#allocation2] sm:$0xff] 0.0
      %120 = vst [vmem:[#allocation2 + $0x8] sm:$0xff] 0.0
      %121 = vst [vmem:[#allocation2 + $0x10] sm:$0xff] 0.0
      %122 = vst [vmem:[#allocation2 + $0x18] sm:$0xff] 0.0
      %123 = vst [vmem:[#allocation2 + $0x20] sm:$0xff] 0.0
      %124 = vst [vmem:[#allocation2 + $0x28] sm:$0xff] 0.0
      %125 = vst [vmem:[#allocation2 + $0x30] sm:$0xff] 0.0
      %126 = vst [vmem:[#allocation2 + $0x38] sm:$0xff] 0.0
      %127 = vst [vmem:[#allocation2 + $0x40] sm:$0xff] 0.0
      %128 = vst [vmem:[#allocation2 + $0x48] sm:$0xff] 0.0
      %129 = vst [vmem:[#allocation2 + $0x50] sm:$0xff] 0.0
      %130 = vst [vmem:[#allocation2 + $0x58] sm:$0xff] 0.0
      %131 = vst [vmem:[#allocation2 + $0x60] sm:$0xff] 0.0
      %132 = vst [vmem:[#allocation2 + $0x68] sm:$0xff] 0.0
      %133 = vst [vmem:[#allocation2 + $0x70] sm:$0xff] 0.0
      %134 = vst [vmem:[#allocation2 + $0x78] sm:$0xff] 0.0
    $region61: #{tpu_custom_call.1} parent=1 // pred_fallthru
      _
    %v135 = vld [vmem:[#allocation3] sm:$0xff]
    %v136 = vld [vmem:[#allocation6] sm:$0x1]
    %v137 = vld [vmem:[#allocation8] sm:$0x1]
    %v138 = vlaneseq
    %v139 = vshrl.u32 %v138, 7
    %v140 = vsub.s32 0, %v139
    %v141 = vrot.slane %v135, %v140
    %143 = vbcast.lane.b32.xlu0 %v141, 256
    %v144 = vpop.permute.xlu0 %143
    %s146 = sor.u32 256, 8
    %147 = vbcast.lane.b32.xlu0 %v141, %s146
    %v148 = vpop.permute.xlu0 %147
    %s150 = sor.u32 256, 16
    %151 = vbcast.lane.b32.xlu0 %v141, %s150
    %v152 = vpop.permute.xlu0 %151
    %s154 = sor.u32 256, 24
    %155 = vbcast.lane.b32.xlu0 %v141, %s154
    %v156 = vpop.permute.xlu0 %155
    %s158 = sor.u32 256, 32
    %159 = vbcast.lane.b32.xlu0 %v141, %s158
    %v160 = vpop.permute.xlu0 %159
    %s162 = sor.u32 256, 40
    %163 = vbcast.lane.b32.xlu0 %v141, %s162
    %v164 = vpop.permute.xlu0 %163
    %s166 = sor.u32 256, 48
    %167 = vbcast.lane.b32.xlu0 %v141, %s166
    %v168 = vpop.permute.xlu0 %167
    %s170 = sor.u32 256, 56
    %171 = vbcast.lane.b32.xlu0 %v141, %s170
    %v172 = vpop.permute.xlu0 %171
    %s174 = sor.u32 256, 64
    %175 = vbcast.lane.b32.xlu0 %v141, %s174
    %v176 = vpop.permute.xlu0 %175
    %s178 = sor.u32 256, 72
    %179 = vbcast.lane.b32.xlu0 %v141, %s178
    %v180 = vpop.permute.xlu0 %179
    %s182 = sor.u32 256, 80
    %183 = vbcast.lane.b32.xlu0 %v141, %s182
    %v184 = vpop.permute.xlu0 %183
    %s186 = sor.u32 256, 88
    %187 = vbcast.lane.b32.xlu0 %v141, %s186
    %v188 = vpop.permute.xlu0 %187
    %s190 = sor.u32 256, 96
    %191 = vbcast.lane.b32.xlu0 %v141, %s190
    %v192 = vpop.permute.xlu0 %191
    %s194 = sor.u32 256, 104
    %195 = vbcast.lane.b32.xlu0 %v141, %s194
    %v196 = vpop.permute.xlu0 %195
    %s198 = sor.u32 256, 112
    %199 = vbcast.lane.b32.xlu0 %v141, %s198
    %v200 = vpop.permute.xlu0 %199
    %s202 = sor.u32 256, 120
    %203 = vbcast.lane.b32.xlu0 %v141, %s202
    %v204 = vpop.permute.xlu0 %203
    %v205 = vlaneseq
    %v206 = vshrl.u32 %v205, 7
    %v207 = vsub.s32 1, %v206
    %v208 = vrot.slane %v135, %v207
    %210 = vbcast.lane.b32.xlu0 %v208, 256
    %v211 = vpop.permute.xlu0 %210
    %s213 = sor.u32 256, 8
    %214 = vbcast.lane.b32.xlu0 %v208, %s213
    %v215 = vpop.permute.xlu0 %214
    %s217 = sor.u32 256, 16
    %218 = vbcast.lane.b32.xlu0 %v208, %s217
    %v219 = vpop.permute.xlu0 %218
    %s221 = sor.u32 256, 24
    %222 = vbcast.lane.b32.xlu0 %v208, %s221
    %v223 = vpop.permute.xlu0 %222
    %s225 = sor.u32 256, 32
    %226 = vbcast.lane.b32.xlu0 %v208, %s225
    %v227 = vpop.permute.xlu0 %226
    %s229 = sor.u32 256, 40
    %230 = vbcast.lane.b32.xlu0 %v208, %s229
    %v231 = vpop.permute.xlu0 %230
    %s233 = sor.u32 256, 48
    %234 = vbcast.lane.b32.xlu0 %v208, %s233
    %v235 = vpop.permute.xlu0 %234
    %s237 = sor.u32 256, 56
    %238 = vbcast.lane.b32.xlu0 %v208, %s237
    %v239 = vpop.permute.xlu0 %238
    %s241 = sor.u32 256, 64
    %242 = vbcast.lane.b32.xlu0 %v208, %s241
    %v243 = vpop.permute.xlu0 %242
    %s245 = sor.u32 256, 72
    %246 = vbcast.lane.b32.xlu0 %v208, %s245
    %v247 = vpop.permute.xlu0 %246
    %s249 = sor.u32 256, 80
    %250 = vbcast.lane.b32.xlu0 %v208, %s249
    %v251 = vpop.permute.xlu0 %250
    %s253 = sor.u32 256, 88
    %254 = vbcast.lane.b32.xlu0 %v208, %s253
    %v255 = vpop.permute.xlu0 %254
    %s257 = sor.u32 256, 96
    %258 = vbcast.lane.b32.xlu0 %v208, %s257
    %v259 = vpop.permute.xlu0 %258
    %s261 = sor.u32 256, 104
    %262 = vbcast.lane.b32.xlu0 %v208, %s261
    %v263 = vpop.permute.xlu0 %262
    %s265 = sor.u32 256, 112
    %266 = vbcast.lane.b32.xlu0 %v208, %s265
    %v267 = vpop.permute.xlu0 %266
    %s269 = sor.u32 256, 120
    %270 = vbcast.lane.b32.xlu0 %v208, %s269
    %v271 = vpop.permute.xlu0 %270
    %v272 = vlaneseq
    %v273 = vshrl.u32 %v272, 7
    %v274 = vsub.s32 2, %v273
    %v275 = vrot.slane %v135, %v274
    %277 = vbcast.lane.b32.xlu0 %v275, 256
    %v278 = vpop.permute.xlu0 %277
    %s280 = sor.u32 256, 8
    %281 = vbcast.lane.b32.xlu0 %v275, %s280
    %v282 = vpop.permute.xlu0 %281
    %s284 = sor.u32 256, 16
    %285 = vbcast.lane.b32.xlu0 %v275, %s284
    %v286 = vpop.permute.xlu0 %285
    %s288 = sor.u32 256, 24
    %289 = vbcast.lane.b32.xlu0 %v275, %s288
    %v290 = vpop.permute.xlu0 %289
    %s292 = sor.u32 256, 32
    %293 = vbcast.lane.b32.xlu0 %v275, %s292
    %v294 = vpop.permute.xlu0 %293
    %s296 = sor.u32 256, 40
    %297 = vbcast.lane.b32.xlu0 %v275, %s296
    %v298 = vpop.permute.xlu0 %297
    %s300 = sor.u32 256, 48
    %301 = vbcast.lane.b32.xlu0 %v275, %s300
    %v302 = vpop.permute.xlu0 %301
    %s304 = sor.u32 256, 56
    %305 = vbcast.lane.b32.xlu0 %v275, %s304
    %v306 = vpop.permute.xlu0 %305
    %s308 = sor.u32 256, 64
    %309 = vbcast.lane.b32.xlu0 %v275, %s308
    %v310 = vpop.permute.xlu0 %309
    %s312 = sor.u32 256, 72
    %313 = vbcast.lane.b32.xlu0 %v275, %s312
    %v314 = vpop.permute.xlu0 %313
    %s316 = sor.u32 256, 80
    %317 = vbcast.lane.b32.xlu0 %v275, %s316
    %v318 = vpop.permute.xlu0 %317
    %s320 = sor.u32 256, 88
    %321 = vbcast.lane.b32.xlu0 %v275, %s320
    %v322 = vpop.permute.xlu0 %321
    %s324 = sor.u32 256, 96
    %325 = vbcast.lane.b32.xlu0 %v275, %s324
    %v326 = vpop.permute.xlu0 %325
    %s328 = sor.u32 256, 104
    %329 = vbcast.lane.b32.xlu0 %v275, %s328
    %v330 = vpop.permute.xlu0 %329
    %s332 = sor.u32 256, 112
    %333 = vbcast.lane.b32.xlu0 %v275, %s332
    %v334 = vpop.permute.xlu0 %333
    %s336 = sor.u32 256, 120
    %337 = vbcast.lane.b32.xlu0 %v275, %s336
    %v338 = vpop.permute.xlu0 %337
    %v339 = vlaneseq
    %v340 = vshrl.u32 %v339, 7
    %v341 = vsub.s32 3, %v340
    %v342 = vrot.slane %v135, %v341
    %344 = vbcast.lane.b32.xlu0 %v342, 256
    %v345 = vpop.permute.xlu0 %344
    %s347 = sor.u32 256, 8
    %348 = vbcast.lane.b32.xlu0 %v342, %s347
    %v349 = vpop.permute.xlu0 %348
    %s351 = sor.u32 256, 16
    %352 = vbcast.lane.b32.xlu0 %v342, %s351
    %v353 = vpop.permute.xlu0 %352
    %s355 = sor.u32 256, 24
    %356 = vbcast.lane.b32.xlu0 %v342, %s355
    %v357 = vpop.permute.xlu0 %356
    %s359 = sor.u32 256, 32
    %360 = vbcast.lane.b32.xlu0 %v342, %s359
    %v361 = vpop.permute.xlu0 %360
    %s363 = sor.u32 256, 40
    %364 = vbcast.lane.b32.xlu0 %v342, %s363
    %v365 = vpop.permute.xlu0 %364
    %s367 = sor.u32 256, 48
    %368 = vbcast.lane.b32.xlu0 %v342, %s367
    %v369 = vpop.permute.xlu0 %368
    %s371 = sor.u32 256, 56
    %372 = vbcast.lane.b32.xlu0 %v342, %s371
    %v373 = vpop.permute.xlu0 %372
    %s375 = sor.u32 256, 64
    %376 = vbcast.lane.b32.xlu0 %v342, %s375
    %v377 = vpop.permute.xlu0 %376
    %s379 = sor.u32 256, 72
    %380 = vbcast.lane.b32.xlu0 %v342, %s379
    %v381 = vpop.permute.xlu0 %380
    %s383 = sor.u32 256, 80
    %384 = vbcast.lane.b32.xlu0 %v342, %s383
    %v385 = vpop.permute.xlu0 %384
    %s387 = sor.u32 256, 88
    %388 = vbcast.lane.b32.xlu0 %v342, %s387
    %v389 = vpop.permute.xlu0 %388
    %s391 = sor.u32 256, 96
    %392 = vbcast.lane.b32.xlu0 %v342, %s391
    %v393 = vpop.permute.xlu0 %392
    %s395 = sor.u32 256, 104
    %396 = vbcast.lane.b32.xlu0 %v342, %s395
    %v397 = vpop.permute.xlu0 %396
    %s399 = sor.u32 256, 112
    %400 = vbcast.lane.b32.xlu0 %v342, %s399
    %v401 = vpop.permute.xlu0 %400
    %s403 = sor.u32 256, 120
    %404 = vbcast.lane.b32.xlu0 %v342, %s403
    %v405 = vpop.permute.xlu0 %404
    %v406 = vlaneseq
    %v407 = vshrl.u32 %v406, 7
    %v408 = vsub.s32 4, %v407
    %v409 = vrot.slane %v135, %v408
    %411 = vbcast.lane.b32.xlu0 %v409, 256
    %v412 = vpop.permute.xlu0 %411
    %s414 = sor.u32 256, 8
    %415 = vbcast.lane.b32.xlu0 %v409, %s414
    %v416 = vpop.permute.xlu0 %415
    %s418 = sor.u32 256, 16
    %419 = vbcast.lane.b32.xlu0 %v409, %s418
    %v420 = vpop.permute.xlu0 %419
    %s422 = sor.u32 256, 24
    %423 = vbcast.lane.b32.xlu0 %v409, %s422
    %v424 = vpop.permute.xlu0 %423
    %s426 = sor.u32 256, 32
    %427 = vbcast.lane.b32.xlu0 %v409, %s426
    %v428 = vpop.permute.xlu0 %427
    %s430 = sor.u32 256, 40
    %431 = vbcast.lane.b32.xlu0 %v409, %s430
    %v432 = vpop.permute.xlu0 %431
    %s434 = sor.u32 256, 48
    %435 = vbcast.lane.b32.xlu0 %v409, %s434
    %v436 = vpop.permute.xlu0 %435
    %s438 = sor.u32 256, 56
    %439 = vbcast.lane.b32.xlu0 %v409, %s438
    %v440 = vpop.permute.xlu0 %439
    %s442 = sor.u32 256, 64
    %443 = vbcast.lane.b32.xlu0 %v409, %s442
    %v444 = vpop.permute.xlu0 %443
    %s446 = sor.u32 256, 72
    %447 = vbcast.lane.b32.xlu0 %v409, %s446
    %v448 = vpop.permute.xlu0 %447
    %s450 = sor.u32 256, 80
    %451 = vbcast.lane.b32.xlu0 %v409, %s450
    %v452 = vpop.permute.xlu0 %451
    %s454 = sor.u32 256, 88
    %455 = vbcast.lane.b32.xlu0 %v409, %s454
    %v456 = vpop.permute.xlu0 %455
    %s458 = sor.u32 256, 96
    %459 = vbcast.lane.b32.xlu0 %v409, %s458
    %v460 = vpop.permute.xlu0 %459
    %s462 = sor.u32 256, 104
    %463 = vbcast.lane.b32.xlu0 %v409, %s462
    %v464 = vpop.permute.xlu0 %463
    %s466 = sor.u32 256, 112
    %467 = vbcast.lane.b32.xlu0 %v409, %s466
    %v468 = vpop.permute.xlu0 %467
    %s470 = sor.u32 256, 120
    %471 = vbcast.lane.b32.xlu0 %v409, %s470
    %v472 = vpop.permute.xlu0 %471
    %v473 = vlaneseq
    %v474 = vshrl.u32 %v473, 7
    %v475 = vsub.s32 5, %v474
    %v476 = vrot.slane %v135, %v475
    %478 = vbcast.lane.b32.xlu0 %v476, 256
    %v479 = vpop.permute.xlu0 %478
    %s481 = sor.u32 256, 8
    %482 = vbcast.lane.b32.xlu0 %v476, %s481
    %v483 = vpop.permute.xlu0 %482
    %s485 = sor.u32 256, 16
    %486 = vbcast.lane.b32.xlu0 %v476, %s485
    %v487 = vpop.permute.xlu0 %486
    %s489 = sor.u32 256, 24
    %490 = vbcast.lane.b32.xlu0 %v476, %s489
    %v491 = vpop.permute.xlu0 %490
    %s493 = sor.u32 256, 32
    %494 = vbcast.lane.b32.xlu0 %v476, %s493
    %v495 = vpop.permute.xlu0 %494
    %s497 = sor.u32 256, 40
    %498 = vbcast.lane.b32.xlu0 %v476, %s497
    %v499 = vpop.permute.xlu0 %498
    %s501 = sor.u32 256, 48
    %502 = vbcast.lane.b32.xlu0 %v476, %s501
    %v503 = vpop.permute.xlu0 %502
    %s505 = sor.u32 256, 56
    %506 = vbcast.lane.b32.xlu0 %v476, %s505
    %v507 = vpop.permute.xlu0 %506
    %s509 = sor.u32 256, 64
    %510 = vbcast.lane.b32.xlu0 %v476, %s509
    %v511 = vpop.permute.xlu0 %510
    %s513 = sor.u32 256, 72
    %514 = vbcast.lane.b32.xlu0 %v476, %s513
    %v515 = vpop.permute.xlu0 %514
    %s517 = sor.u32 256, 80
    %518 = vbcast.lane.b32.xlu0 %v476, %s517
    %v519 = vpop.permute.xlu0 %518
    %s521 = sor.u32 256, 88
    %522 = vbcast.lane.b32.xlu0 %v476, %s521
    %v523 = vpop.permute.xlu0 %522
    %s525 = sor.u32 256, 96
    %526 = vbcast.lane.b32.xlu0 %v476, %s525
    %v527 = vpop.permute.xlu0 %526
    %s529 = sor.u32 256, 104
    %530 = vbcast.lane.b32.xlu0 %v476, %s529
    %v531 = vpop.permute.xlu0 %530
    %s533 = sor.u32 256, 112
    %534 = vbcast.lane.b32.xlu0 %v476, %s533
    %v535 = vpop.permute.xlu0 %534
    %s537 = sor.u32 256, 120
    %538 = vbcast.lane.b32.xlu0 %v476, %s537
    %v539 = vpop.permute.xlu0 %538
    %v540 = vlaneseq
    %v541 = vshrl.u32 %v540, 7
    %v542 = vsub.s32 6, %v541
    %v543 = vrot.slane %v135, %v542
    %545 = vbcast.lane.b32.xlu0 %v543, 256
    %v546 = vpop.permute.xlu0 %545
    %s548 = sor.u32 256, 8
    %549 = vbcast.lane.b32.xlu0 %v543, %s548
    %v550 = vpop.permute.xlu0 %549
    %s552 = sor.u32 256, 16
    %553 = vbcast.lane.b32.xlu0 %v543, %s552
    %v554 = vpop.permute.xlu0 %553
    %s556 = sor.u32 256, 24
    %557 = vbcast.lane.b32.xlu0 %v543, %s556
    %v558 = vpop.permute.xlu0 %557
    %s560 = sor.u32 256, 32
    %561 = vbcast.lane.b32.xlu0 %v543, %s560
    %v562 = vpop.permute.xlu0 %561
    %s564 = sor.u32 256, 40
    %565 = vbcast.lane.b32.xlu0 %v543, %s564
    %v566 = vpop.permute.xlu0 %565
    %s568 = sor.u32 256, 48
    %569 = vbcast.lane.b32.xlu0 %v543, %s568
    %v570 = vpop.permute.xlu0 %569
    %s572 = sor.u32 256, 56
    %573 = vbcast.lane.b32.xlu0 %v543, %s572
    %v574 = vpop.permute.xlu0 %573
    %s576 = sor.u32 256, 64
    %577 = vbcast.lane.b32.xlu0 %v543, %s576
    %v578 = vpop.permute.xlu0 %577
    %s580 = sor.u32 256, 72
    %581 = vbcast.lane.b32.xlu0 %v543, %s580
    %v582 = vpop.permute.xlu0 %581
    %s584 = sor.u32 256, 80
    %585 = vbcast.lane.b32.xlu0 %v543, %s584
    %v586 = vpop.permute.xlu0 %585
    %s588 = sor.u32 256, 88
    %589 = vbcast.lane.b32.xlu0 %v543, %s588
    %v590 = vpop.permute.xlu0 %589
    %s592 = sor.u32 256, 96
    %593 = vbcast.lane.b32.xlu0 %v543, %s592
    %v594 = vpop.permute.xlu0 %593
    %s596 = sor.u32 256, 104
    %597 = vbcast.lane.b32.xlu0 %v543, %s596
    %v598 = vpop.permute.xlu0 %597
    %s600 = sor.u32 256, 112
    %601 = vbcast.lane.b32.xlu0 %v543, %s600
    %v602 = vpop.permute.xlu0 %601
    %s604 = sor.u32 256, 120
    %605 = vbcast.lane.b32.xlu0 %v543, %s604
    %v606 = vpop.permute.xlu0 %605
    %v607 = vlaneseq
    %v608 = vshrl.u32 %v607, 7
    %v609 = vsub.s32 7, %v608
    %v610 = vrot.slane %v135, %v609
    %612 = vbcast.lane.b32.xlu0 %v610, 256
    %v613 = vpop.permute.xlu0 %612
    %s615 = sor.u32 256, 8
    %616 = vbcast.lane.b32.xlu0 %v610, %s615
    %v617 = vpop.permute.xlu0 %616
    %s619 = sor.u32 256, 16
    %620 = vbcast.lane.b32.xlu0 %v610, %s619
    %v621 = vpop.permute.xlu0 %620
    %s623 = sor.u32 256, 24
    %624 = vbcast.lane.b32.xlu0 %v610, %s623
    %v625 = vpop.permute.xlu0 %624
    %s627 = sor.u32 256, 32
    %628 = vbcast.lane.b32.xlu0 %v610, %s627
    %v629 = vpop.permute.xlu0 %628
    %s631 = sor.u32 256, 40
    %632 = vbcast.lane.b32.xlu0 %v610, %s631
    %v633 = vpop.permute.xlu0 %632
    %s635 = sor.u32 256, 48
    %636 = vbcast.lane.b32.xlu0 %v610, %s635
    %v637 = vpop.permute.xlu0 %636
    %s639 = sor.u32 256, 56
    %640 = vbcast.lane.b32.xlu0 %v610, %s639
    %v641 = vpop.permute.xlu0 %640
    %s643 = sor.u32 256, 64
    %644 = vbcast.lane.b32.xlu0 %v610, %s643
    %v645 = vpop.permute.xlu0 %644
    %s647 = sor.u32 256, 72
    %648 = vbcast.lane.b32.xlu0 %v610, %s647
    %v649 = vpop.permute.xlu0 %648
    %s651 = sor.u32 256, 80
    %652 = vbcast.lane.b32.xlu0 %v610, %s651
    %v653 = vpop.permute.xlu0 %652
    %s655 = sor.u32 256, 88
    %656 = vbcast.lane.b32.xlu0 %v610, %s655
    %v657 = vpop.permute.xlu0 %656
    %s659 = sor.u32 256, 96
    %660 = vbcast.lane.b32.xlu0 %v610, %s659
    %v661 = vpop.permute.xlu0 %660
    %s663 = sor.u32 256, 104
    %664 = vbcast.lane.b32.xlu0 %v610, %s663
    %v665 = vpop.permute.xlu0 %664
    %s667 = sor.u32 256, 112
    %668 = vbcast.lane.b32.xlu0 %v610, %s667
    %v669 = vpop.permute.xlu0 %668
    %s671 = sor.u32 256, 120
    %672 = vbcast.lane.b32.xlu0 %v610, %s671
    %v673 = vpop.permute.xlu0 %672
    %v675 = vlaneseq
    %v676 = vshrl.u32 %v675, 7
    %v677 = vsub.s32 0, %v676
    %v678 = vrot.slane %v136, %v677
    %v680 = vmul.f32 %v144, %v678
    %v681 = vmul.f32 %v148, %v678
    %v682 = vmul.f32 %v152, %v678
    %v683 = vmul.f32 %v156, %v678
    %v684 = vmul.f32 %v160, %v678
    %v685 = vmul.f32 %v164, %v678
    %v686 = vmul.f32 %v168, %v678
    %v687 = vmul.f32 %v172, %v678
    %v688 = vmul.f32 %v176, %v678
    %v689 = vmul.f32 %v180, %v678
    %v690 = vmul.f32 %v184, %v678
    %v691 = vmul.f32 %v188, %v678
    %v692 = vmul.f32 %v192, %v678
    %v693 = vmul.f32 %v196, %v678
    %v694 = vmul.f32 %v200, %v678
    %v695 = vmul.f32 %v204, %v678
    %v696 = vmul.f32 %v211, %v678
    %v697 = vmul.f32 %v215, %v678
    %v698 = vmul.f32 %v219, %v678
    %v699 = vmul.f32 %v223, %v678
    %v700 = vmul.f32 %v227, %v678
    %v701 = vmul.f32 %v231, %v678
    %v702 = vmul.f32 %v235, %v678
    %v703 = vmul.f32 %v239, %v678
    %v704 = vmul.f32 %v243, %v678
    %v705 = vmul.f32 %v247, %v678
    %v706 = vmul.f32 %v251, %v678
    %v707 = vmul.f32 %v255, %v678
    %v708 = vmul.f32 %v259, %v678
    %v709 = vmul.f32 %v263, %v678
    %v710 = vmul.f32 %v267, %v678
    %v711 = vmul.f32 %v271, %v678
    %v712 = vmul.f32 %v278, %v678
    %v713 = vmul.f32 %v282, %v678
    %v714 = vmul.f32 %v286, %v678
    %v715 = vmul.f32 %v290, %v678
    %v716 = vmul.f32 %v294, %v678
    %v717 = vmul.f32 %v298, %v678
    %v718 = vmul.f32 %v302, %v678
    %v719 = vmul.f32 %v306, %v678
    %v720 = vmul.f32 %v310, %v678
    %v721 = vmul.f32 %v314, %v678
    %v722 = vmul.f32 %v318, %v678
    %v723 = vmul.f32 %v322, %v678
    %v724 = vmul.f32 %v326, %v678
    %v725 = vmul.f32 %v330, %v678
    %v726 = vmul.f32 %v334, %v678
    %v727 = vmul.f32 %v338, %v678
    %v728 = vmul.f32 %v345, %v678
    %v729 = vmul.f32 %v349, %v678
    %v730 = vmul.f32 %v353, %v678
    %v731 = vmul.f32 %v357, %v678
    %v732 = vmul.f32 %v361, %v678
    %v733 = vmul.f32 %v365, %v678
    %v734 = vmul.f32 %v369, %v678
    %v735 = vmul.f32 %v373, %v678
    %v736 = vmul.f32 %v377, %v678
    %v737 = vmul.f32 %v381, %v678
    %v738 = vmul.f32 %v385, %v678
    %v739 = vmul.f32 %v389, %v678
    %v740 = vmul.f32 %v393, %v678
    %v741 = vmul.f32 %v397, %v678
    %v742 = vmul.f32 %v401, %v678
    %v743 = vmul.f32 %v405, %v678
    %v744 = vmul.f32 %v412, %v678
    %v745 = vmul.f32 %v416, %v678
    %v746 = vmul.f32 %v420, %v678
    %v747 = vmul.f32 %v424, %v678
    %v748 = vmul.f32 %v428, %v678
    %v749 = vmul.f32 %v432, %v678
    %v750 = vmul.f32 %v436, %v678
    %v751 = vmul.f32 %v440, %v678
    %v752 = vmul.f32 %v444, %v678
    %v753 = vmul.f32 %v448, %v678
    %v754 = vmul.f32 %v452, %v678
    %v755 = vmul.f32 %v456, %v678
    %v756 = vmul.f32 %v460, %v678
    %v757 = vmul.f32 %v464, %v678
    %v758 = vmul.f32 %v468, %v678
    %v759 = vmul.f32 %v472, %v678
    %v760 = vmul.f32 %v479, %v678
    %v761 = vmul.f32 %v483, %v678
    %v762 = vmul.f32 %v487, %v678
    %v763 = vmul.f32 %v491, %v678
    %v764 = vmul.f32 %v495, %v678
    %v765 = vmul.f32 %v499, %v678
    %v766 = vmul.f32 %v503, %v678
    %v767 = vmul.f32 %v507, %v678
    %v768 = vmul.f32 %v511, %v678
    %v769 = vmul.f32 %v515, %v678
    %v770 = vmul.f32 %v519, %v678
    %v771 = vmul.f32 %v523, %v678
    %v772 = vmul.f32 %v527, %v678
    %v773 = vmul.f32 %v531, %v678
    %v774 = vmul.f32 %v535, %v678
    %v775 = vmul.f32 %v539, %v678
    %v776 = vmul.f32 %v546, %v678
    %v777 = vmul.f32 %v550, %v678
    %v778 = vmul.f32 %v554, %v678
    %v779 = vmul.f32 %v558, %v678
    %v780 = vmul.f32 %v562, %v678
    %v781 = vmul.f32 %v566, %v678
    %v782 = vmul.f32 %v570, %v678
    %v783 = vmul.f32 %v574, %v678
    %v784 = vmul.f32 %v578, %v678
    %v785 = vmul.f32 %v582, %v678
    %v786 = vmul.f32 %v586, %v678
    %v787 = vmul.f32 %v590, %v678
    %v788 = vmul.f32 %v594, %v678
    %v789 = vmul.f32 %v598, %v678
    %v790 = vmul.f32 %v602, %v678
    %v791 = vmul.f32 %v606, %v678
    %v792 = vmul.f32 %v613, %v678
    %v793 = vmul.f32 %v617, %v678
    %v794 = vmul.f32 %v621, %v678
    %v795 = vmul.f32 %v625, %v678
    %v796 = vmul.f32 %v629, %v678
    %v797 = vmul.f32 %v633, %v678
    %v798 = vmul.f32 %v637, %v678
    %v799 = vmul.f32 %v641, %v678
    %v800 = vmul.f32 %v645, %v678
    %v801 = vmul.f32 %v649, %v678
    %v802 = vmul.f32 %v653, %v678
    %v803 = vmul.f32 %v657, %v678
    %v804 = vmul.f32 %v661, %v678
    %v805 = vmul.f32 %v665, %v678
    %v806 = vmul.f32 %v669, %v678
    %v807 = vmul.f32 %v673, %v678
    %v809 = vlaneseq
    %v810 = vshrl.u32 %v809, 7
    %v811 = vsub.s32 0, %v810
    %v812 = vrot.slane %v137, %v811
    %v814 = vadd.f32 %v680, %v812
    %v815 = vadd.f32 %v681, %v812
    %v816 = vadd.f32 %v682, %v812
    %v817 = vadd.f32 %v683, %v812
    %v818 = vadd.f32 %v684, %v812
    %v819 = vadd.f32 %v685, %v812
    %v820 = vadd.f32 %v686, %v812
    %v821 = vadd.f32 %v687, %v812
    %v822 = vadd.f32 %v688, %v812
    %v823 = vadd.f32 %v689, %v812
    %v824 = vadd.f32 %v690, %v812
    %v825 = vadd.f32 %v691, %v812
    %v826 = vadd.f32 %v692, %v812
    %v827 = vadd.f32 %v693, %v812
    %v828 = vadd.f32 %v694, %v812
    %v829 = vadd.f32 %v695, %v812
    %v830 = vadd.f32 %v696, %v812
    %v831 = vadd.f32 %v697, %v812
    %v832 = vadd.f32 %v698, %v812
    %v833 = vadd.f32 %v699, %v812
    %v834 = vadd.f32 %v700, %v812
    %v835 = vadd.f32 %v701, %v812
    %v836 = vadd.f32 %v702, %v812
    %v837 = vadd.f32 %v703, %v812
    %v838 = vadd.f32 %v704, %v812
    %v839 = vadd.f32 %v705, %v812
    %v840 = vadd.f32 %v706, %v812
    %v841 = vadd.f32 %v707, %v812
    %v842 = vadd.f32 %v708, %v812
    %v843 = vadd.f32 %v709, %v812
    %v844 = vadd.f32 %v710, %v812
    %v845 = vadd.f32 %v711, %v812
    %v846 = vadd.f32 %v712, %v812
    %v847 = vadd.f32 %v713, %v812
    %v848 = vadd.f32 %v714, %v812
    %v849 = vadd.f32 %v715, %v812
    %v850 = vadd.f32 %v716, %v812
    %v851 = vadd.f32 %v717, %v812
    %v852 = vadd.f32 %v718, %v812
    %v853 = vadd.f32 %v719, %v812
    %v854 = vadd.f32 %v720, %v812
    %v855 = vadd.f32 %v721, %v812
    %v856 = vadd.f32 %v722, %v812
    %v857 = vadd.f32 %v723, %v812
    %v858 = vadd.f32 %v724, %v812
    %v859 = vadd.f32 %v725, %v812
    %v860 = vadd.f32 %v726, %v812
    %v861 = vadd.f32 %v727, %v812
    %v862 = vadd.f32 %v728, %v812
    %v863 = vadd.f32 %v729, %v812
    %v864 = vadd.f32 %v730, %v812
    %v865 = vadd.f32 %v731, %v812
    %v866 = vadd.f32 %v732, %v812
    %v867 = vadd.f32 %v733, %v812
    %v868 = vadd.f32 %v734, %v812
    %v869 = vadd.f32 %v735, %v812
    %v870 = vadd.f32 %v736, %v812
    %v871 = vadd.f32 %v737, %v812
    %v872 = vadd.f32 %v738, %v812
    %v873 = vadd.f32 %v739, %v812
    %v874 = vadd.f32 %v740, %v812
    %v875 = vadd.f32 %v741, %v812
    %v876 = vadd.f32 %v742, %v812
    %v877 = vadd.f32 %v743, %v812
    %v878 = vadd.f32 %v744, %v812
    %v879 = vadd.f32 %v745, %v812
    %v880 = vadd.f32 %v746, %v812
    %v881 = vadd.f32 %v747, %v812
    %v882 = vadd.f32 %v748, %v812
    %v883 = vadd.f32 %v749, %v812
    %v884 = vadd.f32 %v750, %v812
    %v885 = vadd.f32 %v751, %v812
    %v886 = vadd.f32 %v752, %v812
    %v887 = vadd.f32 %v753, %v812
    %v888 = vadd.f32 %v754, %v812
    %v889 = vadd.f32 %v755, %v812
    %v890 = vadd.f32 %v756, %v812
    %v891 = vadd.f32 %v757, %v812
    %v892 = vadd.f32 %v758, %v812
    %v893 = vadd.f32 %v759, %v812
    %v894 = vadd.f32 %v760, %v812
    %v895 = vadd.f32 %v761, %v812
    %v896 = vadd.f32 %v762, %v812
    %v897 = vadd.f32 %v763, %v812
    %v898 = vadd.f32 %v764, %v812
    %v899 = vadd.f32 %v765, %v812
    %v900 = vadd.f32 %v766, %v812
    %v901 = vadd.f32 %v767, %v812
    %v902 = vadd.f32 %v768, %v812
    %v903 = vadd.f32 %v769, %v812
    %v904 = vadd.f32 %v770, %v812
    %v905 = vadd.f32 %v771, %v812
    %v906 = vadd.f32 %v772, %v812
    %v907 = vadd.f32 %v773, %v812
    %v908 = vadd.f32 %v774, %v812
    %v909 = vadd.f32 %v775, %v812
    %v910 = vadd.f32 %v776, %v812
    %v911 = vadd.f32 %v777, %v812
    %v912 = vadd.f32 %v778, %v812
    %v913 = vadd.f32 %v779, %v812
    %v914 = vadd.f32 %v780, %v812
    %v915 = vadd.f32 %v781, %v812
    %v916 = vadd.f32 %v782, %v812
    %v917 = vadd.f32 %v783, %v812
    %v918 = vadd.f32 %v784, %v812
    %v919 = vadd.f32 %v785, %v812
    %v920 = vadd.f32 %v786, %v812
    %v921 = vadd.f32 %v787, %v812
    %v922 = vadd.f32 %v788, %v812
    %v923 = vadd.f32 %v789, %v812
    %v924 = vadd.f32 %v790, %v812
    %v925 = vadd.f32 %v791, %v812
    %v926 = vadd.f32 %v792, %v812
    %v927 = vadd.f32 %v793, %v812
    %v928 = vadd.f32 %v794, %v812
    %v929 = vadd.f32 %v795, %v812
    %v930 = vadd.f32 %v796, %v812
    %v931 = vadd.f32 %v797, %v812
    %v932 = vadd.f32 %v798, %v812
    %v933 = vadd.f32 %v799, %v812
    %v934 = vadd.f32 %v800, %v812
    %v935 = vadd.f32 %v801, %v812
    %v936 = vadd.f32 %v802, %v812
    %v937 = vadd.f32 %v803, %v812
    %v938 = vadd.f32 %v804, %v812
    %v939 = vadd.f32 %v805, %v812
    %v940 = vadd.f32 %v806, %v812
    %v941 = vadd.f32 %v807, %v812
    %v942 = vmax.f32 %v814, 0.0
    %v943 = vmax.f32 %v815, 0.0
    %v944 = vmax.f32 %v816, 0.0
    %v945 = vmax.f32 %v817, 0.0
    %v946 = vmax.f32 %v818, 0.0
    %v947 = vmax.f32 %v819, 0.0
    %v948 = vmax.f32 %v820, 0.0
    %v949 = vmax.f32 %v821, 0.0
    %v950 = vmax.f32 %v822, 0.0
    %v951 = vmax.f32 %v823, 0.0
    %v952 = vmax.f32 %v824, 0.0
    %v953 = vmax.f32 %v825, 0.0
    %v954 = vmax.f32 %v826, 0.0
    %v955 = vmax.f32 %v827, 0.0
    %v956 = vmax.f32 %v828, 0.0
    %v957 = vmax.f32 %v829, 0.0
    %v958 = vmax.f32 %v830, 0.0
    %v959 = vmax.f32 %v831, 0.0
    %v960 = vmax.f32 %v832, 0.0
    %v961 = vmax.f32 %v833, 0.0
    %v962 = vmax.f32 %v834, 0.0
    %v963 = vmax.f32 %v835, 0.0
    %v964 = vmax.f32 %v836, 0.0
    %v965 = vmax.f32 %v837, 0.0
    %v966 = vmax.f32 %v838, 0.0
    %v967 = vmax.f32 %v839, 0.0
    %v968 = vmax.f32 %v840, 0.0
    %v969 = vmax.f32 %v841, 0.0
    %v970 = vmax.f32 %v842, 0.0
    %v971 = vmax.f32 %v843, 0.0
    %v972 = vmax.f32 %v844, 0.0
    %v973 = vmax.f32 %v845, 0.0
    %v974 = vmax.f32 %v846, 0.0
    %v975 = vmax.f32 %v847, 0.0
    %v976 = vmax.f32 %v848, 0.0
    %v977 = vmax.f32 %v849, 0.0
    %v978 = vmax.f32 %v850, 0.0
    %v979 = vmax.f32 %v851, 0.0
    %v980 = vmax.f32 %v852, 0.0
    %v981 = vmax.f32 %v853, 0.0
    %v982 = vmax.f32 %v854, 0.0
    %v983 = vmax.f32 %v855, 0.0
    %v984 = vmax.f32 %v856, 0.0
    %v985 = vmax.f32 %v857, 0.0
    %v986 = vmax.f32 %v858, 0.0
    %v987 = vmax.f32 %v859, 0.0
    %v988 = vmax.f32 %v860, 0.0
    %v989 = vmax.f32 %v861, 0.0
    %v990 = vmax.f32 %v862, 0.0
    %v991 = vmax.f32 %v863, 0.0
    %v992 = vmax.f32 %v864, 0.0
    %v993 = vmax.f32 %v865, 0.0
    %v994 = vmax.f32 %v866, 0.0
    %v995 = vmax.f32 %v867, 0.0
    %v996 = vmax.f32 %v868, 0.0
    %v997 = vmax.f32 %v869, 0.0
    %v998 = vmax.f32 %v870, 0.0
    %v999 = vmax.f32 %v871, 0.0
    %v1000 = vmax.f32 %v872, 0.0
    %v1001 = vmax.f32 %v873, 0.0
    %v1002 = vmax.f32 %v874, 0.0
    %v1003 = vmax.f32 %v875, 0.0
    %v1004 = vmax.f32 %v876, 0.0
    %v1005 = vmax.f32 %v877, 0.0
    %v1006 = vmax.f32 %v878, 0.0
    %v1007 = vmax.f32 %v879, 0.0
    %v1008 = vmax.f32 %v880, 0.0
    %v1009 = vmax.f32 %v881, 0.0
    %v1010 = vmax.f32 %v882, 0.0
    %v1011 = vmax.f32 %v883, 0.0
    %v1012 = vmax.f32 %v884, 0.0
    %v1013 = vmax.f32 %v885, 0.0
    %v1014 = vmax.f32 %v886, 0.0
    %v1015 = vmax.f32 %v887, 0.0
    %v1016 = vmax.f32 %v888, 0.0
    %v1017 = vmax.f32 %v889, 0.0
    %v1018 = vmax.f32 %v890, 0.0
    %v1019 = vmax.f32 %v891, 0.0
    %v1020 = vmax.f32 %v892, 0.0
    %v1021 = vmax.f32 %v893, 0.0
    %v1022 = vmax.f32 %v894, 0.0
    %v1023 = vmax.f32 %v895, 0.0
    %v1024 = vmax.f32 %v896, 0.0
    %v1025 = vmax.f32 %v897, 0.0
    %v1026 = vmax.f32 %v898, 0.0
    %v1027 = vmax.f32 %v899, 0.0
    %v1028 = vmax.f32 %v900, 0.0
    %v1029 = vmax.f32 %v901, 0.0
    %v1030 = vmax.f32 %v902, 0.0
    %v1031 = vmax.f32 %v903, 0.0
    %v1032 = vmax.f32 %v904, 0.0
    %v1033 = vmax.f32 %v905, 0.0
    %v1034 = vmax.f32 %v906, 0.0
    %v1035 = vmax.f32 %v907, 0.0
    %v1036 = vmax.f32 %v908, 0.0
    %v1037 = vmax.f32 %v909, 0.0
    %v1038 = vmax.f32 %v910, 0.0
    %v1039 = vmax.f32 %v911, 0.0
    %v1040 = vmax.f32 %v912, 0.0
    %v1041 = vmax.f32 %v913, 0.0
    %v1042 = vmax.f32 %v914, 0.0
    %v1043 = vmax.f32 %v915, 0.0
    %v1044 = vmax.f32 %v916, 0.0
    %v1045 = vmax.f32 %v917, 0.0
    %v1046 = vmax.f32 %v918, 0.0
    %v1047 = vmax.f32 %v919, 0.0
    %v1048 = vmax.f32 %v920, 0.0
    %v1049 = vmax.f32 %v921, 0.0
    %v1050 = vmax.f32 %v922, 0.0
    %v1051 = vmax.f32 %v923, 0.0
    %v1052 = vmax.f32 %v924, 0.0
    %v1053 = vmax.f32 %v925, 0.0
    %v1054 = vmax.f32 %v926, 0.0
    %v1055 = vmax.f32 %v927, 0.0
    %v1056 = vmax.f32 %v928, 0.0
    %v1057 = vmax.f32 %v929, 0.0
    %v1058 = vmax.f32 %v930, 0.0
    %v1059 = vmax.f32 %v931, 0.0
    %v1060 = vmax.f32 %v932, 0.0
    %v1061 = vmax.f32 %v933, 0.0
    %v1062 = vmax.f32 %v934, 0.0
    %v1063 = vmax.f32 %v935, 0.0
    %v1064 = vmax.f32 %v936, 0.0
    %v1065 = vmax.f32 %v937, 0.0
    %v1066 = vmax.f32 %v938, 0.0
    %v1067 = vmax.f32 %v939, 0.0
    %v1068 = vmax.f32 %v940, 0.0
    %v1069 = vmax.f32 %v941, 0.0
    %v1070 = vld [vmem:[#allocation9] sm:$0xff]
    %v1071 = vld [vmem:[#allocation9 + $0x8] sm:$0xff]
    %v1072 = vld [vmem:[#allocation9 + $0x10] sm:$0xff]
    %v1073 = vld [vmem:[#allocation9 + $0x18] sm:$0xff]
    %v1074 = vld [vmem:[#allocation9 + $0x20] sm:$0xff]
    %v1075 = vld [vmem:[#allocation9 + $0x28] sm:$0xff]
    %v1076 = vld [vmem:[#allocation9 + $0x30] sm:$0xff]
    %v1077 = vld [vmem:[#allocation9 + $0x38] sm:$0xff]
    %v1078 = vld [vmem:[#allocation9 + $0x40] sm:$0xff]
    %v1079 = vld [vmem:[#allocation9 + $0x48] sm:$0xff]
    %v1080 = vld [vmem:[#allocation9 + $0x50] sm:$0xff]
    %v1081 = vld [vmem:[#allocation9 + $0x58] sm:$0xff]
    %v1082 = vld [vmem:[#allocation9 + $0x60] sm:$0xff]
    %v1083 = vld [vmem:[#allocation9 + $0x68] sm:$0xff]
    %v1084 = vld [vmem:[#allocation9 + $0x70] sm:$0xff]
    %v1085 = vld [vmem:[#allocation9 + $0x78] sm:$0xff]
    %v1086 = vld [vmem:[#allocation11] sm:$0x1]
    %v1088 = vlaneseq
    %v1089 = vshrl.u32 %v1088, 7
    %v1090 = vsub.s32 0, %v1089
    %v1091 = vrot.slane %v1086, %v1090
    %1093 = vmatprep.subr.mxu0 0.0
    %1094 = vmatpush1.msra.mxu0 %v1070
    %1095 = vmatprep.subr.mxu0 0.0
    %1096 = vmatpush1.msra.mxu0 %v1071
    %1097 = vmatprep.subr.mxu0 0.0
    %1098 = vmatpush1.msra.mxu0 %v1072
    %1099 = vmatprep.subr.mxu0 0.0
    %1100 = vmatpush1.msra.mxu0 %v1073
    %1101 = vmatprep.subr.mxu0 0.0
    %1102 = vmatpush1.msra.mxu0 %v1074
    %1103 = vmatprep.subr.mxu0 0.0
    %1104 = vmatpush1.msra.mxu0 %v1075
    %1105 = vmatprep.subr.mxu0 0.0
    %1106 = vmatpush1.msra.mxu0 %v1076
    %1107 = vmatprep.subr.mxu0 0.0
    %1108 = vmatpush1.msra.mxu0 %v1077
    %1109 = vmatprep.subr.mxu0 0.0
    %1110 = vmatpush1.msra.mxu0 %v1078
    %1111 = vmatprep.subr.mxu0 0.0
    %1112 = vmatpush1.msra.mxu0 %v1079
    %1113 = vmatprep.subr.mxu0 0.0
    %1114 = vmatpush1.msra.mxu0 %v1080
    %1115 = vmatprep.subr.mxu0 0.0
    %1116 = vmatpush1.msra.mxu0 %v1081
    %1117 = vmatprep.subr.mxu0 0.0
    %1118 = vmatpush1.msra.mxu0 %v1082
    %1119 = vmatprep.subr.mxu0 0.0
    %1120 = vmatpush1.msra.mxu0 %v1083
    %1121 = vmatprep.subr.mxu0 0.0
    %1122 = vmatpush1.msra.mxu0 %v1084
    %1123 = vmatprep.subr.mxu0 0.0
    %1124 = vmatpush1.msra.mxu0 %v1085
    %1125 = vmatprep.subr.mxu0 0.0
    %1126 = vmatpush1.msra.mxu0 0.0
    %1127 = vmatprep.subr.mxu0 0.0
    %1128 = vmatpush1.msra.mxu0 0.0
    %1129 = vmatprep.subr.mxu0 0.0
    %1130 = vmatpush1.msra.mxu0 0.0
    %1131 = vmatprep.subr.mxu0 0.0
    %1132 = vmatpush1.msra.mxu0 0.0
    %1133 = vmatprep.subr.mxu0 0.0
    %1134 = vmatpush1.msra.mxu0 0.0
    %1135 = vmatprep.subr.mxu0 0.0
    %1136 = vmatpush1.msra.mxu0 0.0
    %1137 = vmatprep.subr.mxu0 0.0
    %1138 = vmatpush1.msra.mxu0 0.0
    %1139 = vmatprep.subr.mxu0 0.0
    %1140 = vmatpush1.msra.mxu0 0.0
    %1141 = vmatprep.subr.mxu0 0.0
    %1142 = vmatpush1.msra.mxu0 0.0
    %1143 = vmatprep.subr.mxu0 0.0
    %1144 = vmatpush1.msra.mxu0 0.0
    %1145 = vmatprep.subr.mxu0 0.0
    %1146 = vmatpush1.msra.mxu0 0.0
    %1147 = vmatprep.subr.mxu0 0.0
    %1148 = vmatpush1.msra.mxu0 0.0
    %1149 = vmatprep.subr.mxu0 0.0
    %1150 = vmatpush1.msra.mxu0 0.0
    %1151 = vmatprep.subr.mxu0 0.0
    %1152 = vmatpush1.msra.mxu0 0.0
    %1153 = vmatprep.subr.mxu0 0.0
    %1154 = vmatpush1.msra.mxu0 0.0
    %1155 = vmatprep.subr.mxu0 0.0
    %1156 = vmatpush1.msra.mxu0 0.0
    %1157 = vmatprep.mubr.f32.mxu0 0.0
    %1158 = vmatmul.mubr.f32.gmra.mrb[0].mxu0 %v942
    %v1159 = vpop.f32.mrb[0].mxu0
    %v1160 = vadd.f32 %v1091, %v1159
    %v1161 = vpop.f32.mrb[0].mxu0
    %1162 = vmatprep.mubr.f32.mxu0 0.0
    %1163 = vmatmul.mubr.f32.gmra.mrb[0].mxu0 %v943
    %v1164 = vpop.f32.mrb[0].mxu0
    %v1165 = vadd.f32 %v1091, %v1164
    %v1166 = vpop.f32.mrb[0].mxu0
    %1167 = vmatprep.mubr.f32.mxu0 0.0
    %1168 = vmatmul.mubr.f32.gmra.mrb[0].mxu0 %v944
    %v1169 = vpop.f32.mrb[0].mxu0
    %v1170 = vadd.f32 %v1091, %v1169
    %v1171 = vpop.f32.mrb[0].mxu0
    %1172 = vmatprep.mubr.f32.mxu0 0.0
    %1173 = vmatmul.mubr.f32.gmra.mrb[0].mxu0 %v945
    %v1174 = vpop.f32.mrb[0].mxu0
    %v1175 = vadd.f32 %v1091, %v1174
    %v1176 = vpop.f32.mrb[0].mxu0
    %1177 = vmatprep.mubr.f32.mxu0 0.0
    %1178 = vmatmul.mubr.f32.gmra.mrb[0].mxu0 %v946
    %v1179 = vpop.f32.mrb[0].mxu0
    %v1180 = vadd.f32 %v1091, %v1179
    %v1181 = vpop.f32.mrb[0].mxu0
    %1182 = vmatprep.mubr.f32.mxu0 0.0
    %1183 = vmatmul.mubr.f32.gmra.mrb[0].mxu0 %v947
    %v1184 = vpop.f32.mrb[0].mxu0
    %v1185 = vadd.f32 %v1091, %v1184
    %v1186 = vpop.f32.mrb[0].mxu0
    %1187 = vmatprep.mubr.f32.mxu0 0.0
    %1188 = vmatmul.mubr.f32.gmra.mrb[0].mxu0 %v948
    %v1189 = vpop.f32.mrb[0].mxu0
    %v1190 = vadd.f32 %v1091, %v1189
    %v1191 = vpop.f32.mrb[0].mxu0
    %1192 = vmatprep.mubr.f32.mxu0 0.0
    %1193 = vmatmul.mubr.f32.gmra.mrb[0].mxu0 %v949
    %v1194 = vpop.f32.mrb[0].mxu0
    %v1195 = vadd.f32 %v1091, %v1194
    %v1196 = vpop.f32.mrb[0].mxu0
    %1197 = vmatprep.mubr.f32.mxu0 0.0
    %1198 = vmatmul.mubr.f32.gmra.mrb[0].mxu0 %v950
    %v1199 = vpop.f32.mrb[0].mxu0
    %v1200 = vadd.f32 %v1091, %v1199
    %v1201 = vpop.f32.mrb[0].mxu0
    %1202 = vmatprep.mubr.f32.mxu0 0.0
    %1203 = vmatmul.mubr.f32.gmra.mrb[0].mxu0 %v951
    %v1204 = vpop.f32.mrb[0].mxu0
    %v1205 = vadd.f32 %v1091, %v1204
    %v1206 = vpop.f32.mrb[0].mxu0
    %1207 = vmatprep.mubr.f32.mxu0 0.0
    %1208 = vmatmul.mubr.f32.gmra.mrb[0].mxu0 %v952
    %v1209 = vpop.f32.mrb[0].mxu0
    %v1210 = vadd.f32 %v1091, %v1209
    %v1211 = vpop.f32.mrb[0].mxu0
    %1212 = vmatprep.mubr.f32.mxu0 0.0
    %1213 = vmatmul.mubr.f32.gmra.mrb[0].mxu0 %v953
    %v1214 = vpop.f32.mrb[0].mxu0
    %v1215 = vadd.f32 %v1091, %v1214
    %v1216 = vpop.f32.mrb[0].mxu0
    %1217 = vmatprep.mubr.f32.mxu0 0.0
    %1218 = vmatmul.mubr.f32.gmra.mrb[0].mxu0 %v954
    %v1219 = vpop.f32.mrb[0].mxu0
    %v1220 = vadd.f32 %v1091, %v1219
    %v1221 = vpop.f32.mrb[0].mxu0
    %1222 = vmatprep.mubr.f32.mxu0 0.0
    %1223 = vmatmul.mubr.f32.gmra.mrb[0].mxu0 %v955
    %v1224 = vpop.f32.mrb[0].mxu0
    %v1225 = vadd.f32 %v1091, %v1224
    %v1226 = vpop.f32.mrb[0].mxu0
    %1227 = vmatprep.mubr.f32.mxu0 0.0
    %1228 = vmatmul.mubr.f32.gmra.mrb[0].mxu0 %v956
    %v1229 = vpop.f32.mrb[0].mxu0
    %v1230 = vadd.f32 %v1091, %v1229
    %v1231 = vpop.f32.mrb[0].mxu0
    %1232 = vmatprep.mubr.f32.mxu0 0.0
    %1233 = vmatmul.mubr.f32.gmra.mrb[0].mxu0 %v957
    %v1234 = vpop.f32.mrb[0].mxu0
    %v1235 = vadd.f32 %v1091, %v1234
    %v1236 = vpop.f32.mrb[0].mxu0
    %1237 = vmatprep.mubr.f32.mxu0 0.0
    %1238 = vmatmul.mubr.f32.gmra.mrb[0].mxu0 %v958
    %v1239 = vpop.f32.mrb[0].mxu0
    %v1240 = vadd.f32 %v1091, %v1239
    %v1241 = vpop.f32.mrb[0].mxu0
    %1242 = vmatprep.mubr.f32.mxu0 0.0
    %1243 = vmatmul.mubr.f32.gmra.mrb[0].mxu0 %v959
    %v1244 = vpop.f32.mrb[0].mxu0
    %v1245 = vadd.f32 %v1091, %v1244
    %v1246 = vpop.f32.mrb[0].mxu0
    %1247 = vmatprep.mubr.f32.mxu0 0.0
    %1248 = vmatmul.mubr.f32.gmra.mrb[0].mxu0 %v960
    %v1249 = vpop.f32.mrb[0].mxu0
    %v1250 = vadd.f32 %v1091, %v1249
    %v1251 = vpop.f32.mrb[0].mxu0
    %1252 = vmatprep.mubr.f32.mxu0 0.0
    %1253 = vmatmul.mubr.f32.gmra.mrb[0].mxu0 %v961
    %v1254 = vpop.f32.mrb[0].mxu0
    %v1255 = vadd.f32 %v1091, %v1254
    %v1256 = vpop.f32.mrb[0].mxu0
    %1257 = vmatprep.mubr.f32.mxu0 0.0
    %1258 = vmatmul.mubr.f32.gmra.mrb[0].mxu0 %v962
    %v1259 = vpop.f32.mrb[0].mxu0
    %v1260 = vadd.f32 %v1091, %v1259
    %v1261 = vpop.f32.mrb[0].mxu0
    %1262 = vmatprep.mubr.f32.mxu0 0.0
    %1263 = vmatmul.mubr.f32.gmra.mrb[0].mxu0 %v963
    %v1264 = vpop.f32.mrb[0].mxu0
    %v1265 = vadd.f32 %v1091, %v1264
    %v1266 = vpop.f32.mrb[0].mxu0
    %1267 = vmatprep.mubr.f32.mxu0 0.0
    %1268 = vmatmul.mubr.f32.gmra.mrb[0].mxu0 %v964
    %v1269 = vpop.f32.mrb[0].mxu0
    %v1270 = vadd.f32 %v1091, %v1269
    %v1271 = vpop.f32.mrb[0].mxu0
    %1272 = vmatprep.mubr.f32.mxu0 0.0
    %1273 = vmatmul.mubr.f32.gmra.mrb[0].mxu0 %v965
    %v1274 = vpop.f32.mrb[0].mxu0
    %v1275 = vadd.f32 %v1091, %v1274
    %v1276 = vpop.f32.mrb[0].mxu0
    %1277 = vmatprep.mubr.f32.mxu0 0.0
    %1278 = vmatmul.mubr.f32.gmra.mrb[0].mxu0 %v966
    %v1279 = vpop.f32.mrb[0].mxu0
    %v1280 = vadd.f32 %v1091, %v1279
    %v1281 = vpop.f32.mrb[0].mxu0
    %1282 = vmatprep.mubr.f32.mxu0 0.0
    %1283 = vmatmul.mubr.f32.gmra.mrb[0].mxu0 %v967
    %v1284 = vpop.f32.mrb[0].mxu0
    %v1285 = vadd.f32 %v1091, %v1284
    %v1286 = vpop.f32.mrb[0].mxu0
    %1287 = vmatprep.mubr.f32.mxu0 0.0
    %1288 = vmatmul.mubr.f32.gmra.mrb[0].mxu0 %v968
    %v1289 = vpop.f32.mrb[0].mxu0
    %v1290 = vadd.f32 %v1091, %v1289
    %v1291 = vpop.f32.mrb[0].mxu0
    %1292 = vmatprep.mubr.f32.mxu0 0.0
    %1293 = vmatmul.mubr.f32.gmra.mrb[0].mxu0 %v969
    %v1294 = vpop.f32.mrb[0].mxu0
    %v1295 = vadd.f32 %v1091, %v1294
    %v1296 = vpop.f32.mrb[0].mxu0
    %1297 = vmatprep.mubr.f32.mxu0 0.0
    %1298 = vmatmul.mubr.f32.gmra.mrb[0].mxu0 %v970
    %v1299 = vpop.f32.mrb[0].mxu0
    %v1300 = vadd.f32 %v1091, %v1299
    %v1301 = vpop.f32.mrb[0].mxu0
    %1302 = vmatprep.mubr.f32.mxu0 0.0
    %1303 = vmatmul.mubr.f32.gmra.mrb[0].mxu0 %v971
    %v1304 = vpop.f32.mrb[0].mxu0
    %v1305 = vadd.f32 %v1091, %v1304
    %v1306 = vpop.f32.mrb[0].mxu0
    %1307 = vmatprep.mubr.f32.mxu0 0.0
    %1308 = vmatmul.mubr.f32.gmra.mrb[0].mxu0 %v972
    %v1309 = vpop.f32.mrb[0].mxu0
    %v1310 = vadd.f32 %v1091, %v1309
    %v1311 = vpop.f32.mrb[0].mxu0
    %1312 = vmatprep.mubr.f32.mxu0 0.0
    %1313 = vmatmul.mubr.f32.gmra.mrb[0].mxu0 %v973
    %v1314 = vpop.f32.mrb[0].mxu0
    %v1315 = vadd.f32 %v1091, %v1314
    %v1316 = vpop.f32.mrb[0].mxu0
    %1317 = vmatprep.mubr.f32.mxu0 0.0
    %1318 = vmatmul.mubr.f32.gmra.mrb[0].mxu0 %v974
    %v1319 = vpop.f32.mrb[0].mxu0
    %v1320 = vadd.f32 %v1091, %v1319
    %v1321 = vpop.f32.mrb[0].mxu0
    %1322 = vmatprep.mubr.f32.mxu0 0.0
    %1323 = vmatmul.mubr.f32.gmra.mrb[0].mxu0 %v975
    %v1324 = vpop.f32.mrb[0].mxu0
    %v1325 = vadd.f32 %v1091, %v1324
    %v1326 = vpop.f32.mrb[0].mxu0
    %1327 = vmatprep.mubr.f32.mxu0 0.0
    %1328 = vmatmul.mubr.f32.gmra.mrb[0].mxu0 %v976
    %v1329 = vpop.f32.mrb[0].mxu0
    %v1330 = vadd.f32 %v1091, %v1329
    %v1331 = vpop.f32.mrb[0].mxu0
    %1332 = vmatprep.mubr.f32.mxu0 0.0
    %1333 = vmatmul.mubr.f32.gmra.mrb[0].mxu0 %v977
    %v1334 = vpop.f32.mrb[0].mxu0
    %v1335 = vadd.f32 %v1091, %v1334
    %v1336 = vpop.f32.mrb[0].mxu0
    %1337 = vmatprep.mubr.f32.mxu0 0.0
    %1338 = vmatmul.mubr.f32.gmra.mrb[0].mxu0 %v978
    %v1339 = vpop.f32.mrb[0].mxu0
    %v1340 = vadd.f32 %v1091, %v1339
    %v1341 = vpop.f32.mrb[0].mxu0
    %1342 = vmatprep.mubr.f32.mxu0 0.0
    %1343 = vmatmul.mubr.f32.gmra.mrb[0].mxu0 %v979
    %v1344 = vpop.f32.mrb[0].mxu0
    %v1345 = vadd.f32 %v1091, %v1344
    %v1346 = vpop.f32.mrb[0].mxu0
    %1347 = vmatprep.mubr.f32.mxu0 0.0
    %1348 = vmatmul.mubr.f32.gmra.mrb[0].mxu0 %v980
    %v1349 = vpop.f32.mrb[0].mxu0
    %v1350 = vadd.f32 %v1091, %v1349
    %v1351 = vpop.f32.mrb[0].mxu0
    %1352 = vmatprep.mubr.f32.mxu0 0.0
    %1353 = vmatmul.mubr.f32.gmra.mrb[0].mxu0 %v981
    %v1354 = vpop.f32.mrb[0].mxu0
    %v1355 = vadd.f32 %v1091, %v1354
    %v1356 = vpop.f32.mrb[0].mxu0
    %1357 = vmatprep.mubr.f32.mxu0 0.0
    %1358 = vmatmul.mubr.f32.gmra.mrb[0].mxu0 %v982
    %v1359 = vpop.f32.mrb[0].mxu0
    %v1360 = vadd.f32 %v1091, %v1359
    %v1361 = vpop.f32.mrb[0].mxu0
    %1362 = vmatprep.mubr.f32.mxu0 0.0
    %1363 = vmatmul.mubr.f32.gmra.mrb[0].mxu0 %v983
    %v1364 = vpop.f32.mrb[0].mxu0
    %v1365 = vadd.f32 %v1091, %v1364
    %v1366 = vpop.f32.mrb[0].mxu0
    %1367 = vmatprep.mubr.f32.mxu0 0.0
    %1368 = vmatmul.mubr.f32.gmra.mrb[0].mxu0 %v984
    %v1369 = vpop.f32.mrb[0].mxu0
    %v1370 = vadd.f32 %v1091, %v1369
    %v1371 = vpop.f32.mrb[0].mxu0
    %1372 = vmatprep.mubr.f32.mxu0 0.0
    %1373 = vmatmul.mubr.f32.gmra.mrb[0].mxu0 %v985
    %v1374 = vpop.f32.mrb[0].mxu0
    %v1375 = vadd.f32 %v1091, %v1374
    %v1376 = vpop.f32.mrb[0].mxu0
    %1377 = vmatprep.mubr.f32.mxu0 0.0
    %1378 = vmatmul.mubr.f32.gmra.mrb[0].mxu0 %v986
    %v1379 = vpop.f32.mrb[0].mxu0
    %v1380 = vadd.f32 %v1091, %v1379
    %v1381 = vpop.f32.mrb[0].mxu0
    %1382 = vmatprep.mubr.f32.mxu0 0.0
    %1383 = vmatmul.mubr.f32.gmra.mrb[0].mxu0 %v987
    %v1384 = vpop.f32.mrb[0].mxu0
    %v1385 = vadd.f32 %v1091, %v1384
    %v1386 = vpop.f32.mrb[0].mxu0
    %1387 = vmatprep.mubr.f32.mxu0 0.0
    %1388 = vmatmul.mubr.f32.gmra.mrb[0].mxu0 %v988
    %v1389 = vpop.f32.mrb[0].mxu0
    %v1390 = vadd.f32 %v1091, %v1389
    %v1391 = vpop.f32.mrb[0].mxu0
    %1392 = vmatprep.mubr.f32.mxu0 0.0
    %1393 = vmatmul.mubr.f32.gmra.mrb[0].mxu0 %v989
    %v1394 = vpop.f32.mrb[0].mxu0
    %v1395 = vadd.f32 %v1091, %v1394
    %v1396 = vpop.f32.mrb[0].mxu0
    %1397 = vmatprep.mubr.f32.mxu0 0.0
    %1398 = vmatmul.mubr.f32.gmra.mrb[0].mxu0 %v990
    %v1399 = vpop.f32.mrb[0].mxu0
    %v1400 = vadd.f32 %v1091, %v1399
    %v1401 = vpop.f32.mrb[0].mxu0
    %1402 = vmatprep.mubr.f32.mxu0 0.0
    %1403 = vmatmul.mubr.f32.gmra.mrb[0].mxu0 %v991
    %v1404 = vpop.f32.mrb[0].mxu0
    %v1405 = vadd.f32 %v1091, %v1404
    %v1406 = vpop.f32.mrb[0].mxu0
    %1407 = vmatprep.mubr.f32.mxu0 0.0
    %1408 = vmatmul.mubr.f32.gmra.mrb[0].mxu0 %v992
    %v1409 = vpop.f32.mrb[0].mxu0
    %v1410 = vadd.f32 %v1091, %v1409
    %v1411 = vpop.f32.mrb[0].mxu0
    %1412 = vmatprep.mubr.f32.mxu0 0.0
    %1413 = vmatmul.mubr.f32.gmra.mrb[0].mxu0 %v993
    %v1414 = vpop.f32.mrb[0].mxu0
    %v1415 = vadd.f32 %v1091, %v1414
    %v1416 = vpop.f32.mrb[0].mxu0
    %1417 = vmatprep.mubr.f32.mxu0 0.0
    %1418 = vmatmul.mubr.f32.gmra.mrb[0].mxu0 %v994
    %v1419 = vpop.f32.mrb[0].mxu0
    %v1420 = vadd.f32 %v1091, %v1419
    %v1421 = vpop.f32.mrb[0].mxu0
    %1422 = vmatprep.mubr.f32.mxu0 0.0
    %1423 = vmatmul.mubr.f32.gmra.mrb[0].mxu0 %v995
    %v1424 = vpop.f32.mrb[0].mxu0
    %v1425 = vadd.f32 %v1091, %v1424
    %v1426 = vpop.f32.mrb[0].mxu0
    %1427 = vmatprep.mubr.f32.mxu0 0.0
    %1428 = vmatmul.mubr.f32.gmra.mrb[0].mxu0 %v996
    %v1429 = vpop.f32.mrb[0].mxu0
    %v1430 = vadd.f32 %v1091, %v1429
    %v1431 = vpop.f32.mrb[0].mxu0
    %1432 = vmatprep.mubr.f32.mxu0 0.0
    %1433 = vmatmul.mubr.f32.gmra.mrb[0].mxu0 %v997
    %v1434 = vpop.f32.mrb[0].mxu0
    %v1435 = vadd.f32 %v1091, %v1434
    %v1436 = vpop.f32.mrb[0].mxu0
    %1437 = vmatprep.mubr.f32.mxu0 0.0
    %1438 = vmatmul.mubr.f32.gmra.mrb[0].mxu0 %v998
    %v1439 = vpop.f32.mrb[0].mxu0
    %v1440 = vadd.f32 %v1091, %v1439
    %v1441 = vpop.f32.mrb[0].mxu0
    %1442 = vmatprep.mubr.f32.mxu0 0.0
    %1443 = vmatmul.mubr.f32.gmra.mrb[0].mxu0 %v999
    %v1444 = vpop.f32.mrb[0].mxu0
    %v1445 = vadd.f32 %v1091, %v1444
    %v1446 = vpop.f32.mrb[0].mxu0
    %1447 = vmatprep.mubr.f32.mxu0 0.0
    %1448 = vmatmul.mubr.f32.gmra.mrb[0].mxu0 %v1000
    %v1449 = vpop.f32.mrb[0].mxu0
    %v1450 = vadd.f32 %v1091, %v1449
    %v1451 = vpop.f32.mrb[0].mxu0
    %1452 = vmatprep.mubr.f32.mxu0 0.0
    %1453 = vmatmul.mubr.f32.gmra.mrb[0].mxu0 %v1001
    %v1454 = vpop.f32.mrb[0].mxu0
    %v1455 = vadd.f32 %v1091, %v1454
    %v1456 = vpop.f32.mrb[0].mxu0
    %1457 = vmatprep.mubr.f32.mxu0 0.0
    %1458 = vmatmul.mubr.f32.gmra.mrb[0].mxu0 %v1002
    %v1459 = vpop.f32.mrb[0].mxu0
    %v1460 = vadd.f32 %v1091, %v1459
    %v1461 = vpop.f32.mrb[0].mxu0
    %1462 = vmatprep.mubr.f32.mxu0 0.0
    %1463 = vmatmul.mubr.f32.gmra.mrb[0].mxu0 %v1003
    %v1464 = vpop.f32.mrb[0].mxu0
    %v1465 = vadd.f32 %v1091, %v1464
    %v1466 = vpop.f32.mrb[0].mxu0
    %1467 = vmatprep.mubr.f32.mxu0 0.0
    %1468 = vmatmul.mubr.f32.gmra.mrb[0].mxu0 %v1004
    %v1469 = vpop.f32.mrb[0].mxu0
    %v1470 = vadd.f32 %v1091, %v1469
    %v1471 = vpop.f32.mrb[0].mxu0
    %1472 = vmatprep.mubr.f32.mxu0 0.0
    %1473 = vmatmul.mubr.f32.gmra.mrb[0].mxu0 %v1005
    %v1474 = vpop.f32.mrb[0].mxu0
    %v1475 = vadd.f32 %v1091, %v1474
    %v1476 = vpop.f32.mrb[0].mxu0
    %1477 = vmatprep.mubr.f32.mxu0 0.0
    %1478 = vmatmul.mubr.f32.gmra.mrb[0].mxu0 %v1006
    %v1479 = vpop.f32.mrb[0].mxu0
    %v1480 = vadd.f32 %v1091, %v1479
    %v1481 = vpop.f32.mrb[0].mxu0
    %1482 = vmatprep.mubr.f32.mxu0 0.0
    %1483 = vmatmul.mubr.f32.gmra.mrb[0].mxu0 %v1007
    %v1484 = vpop.f32.mrb[0].mxu0
    %v1485 = vadd.f32 %v1091, %v1484
    %v1486 = vpop.f32.mrb[0].mxu0
    %1487 = vmatprep.mubr.f32.mxu0 0.0
    %1488 = vmatmul.mubr.f32.gmra.mrb[0].mxu0 %v1008
    %v1489 = vpop.f32.mrb[0].mxu0
    %v1490 = vadd.f32 %v1091, %v1489
    %v1491 = vpop.f32.mrb[0].mxu0
    %1492 = vmatprep.mubr.f32.mxu0 0.0
    %1493 = vmatmul.mubr.f32.gmra.mrb[0].mxu0 %v1009
    %v1494 = vpop.f32.mrb[0].mxu0
    %v1495 = vadd.f32 %v1091, %v1494
    %v1496 = vpop.f32.mrb[0].mxu0
    %1497 = vmatprep.mubr.f32.mxu0 0.0
    %1498 = vmatmul.mubr.f32.gmra.mrb[0].mxu0 %v1010
    %v1499 = vpop.f32.mrb[0].mxu0
    %v1500 = vadd.f32 %v1091, %v1499
    %v1501 = vpop.f32.mrb[0].mxu0
    %1502 = vmatprep.mubr.f32.mxu0 0.0
    %1503 = vmatmul.mubr.f32.gmra.mrb[0].mxu0 %v1011
    %v1504 = vpop.f32.mrb[0].mxu0
    %v1505 = vadd.f32 %v1091, %v1504
    %v1506 = vpop.f32.mrb[0].mxu0
    %1507 = vmatprep.mubr.f32.mxu0 0.0
    %1508 = vmatmul.mubr.f32.gmra.mrb[0].mxu0 %v1012
    %v1509 = vpop.f32.mrb[0].mxu0
    %v1510 = vadd.f32 %v1091, %v1509
    %v1511 = vpop.f32.mrb[0].mxu0
    %1512 = vmatprep.mubr.f32.mxu0 0.0
    %1513 = vmatmul.mubr.f32.gmra.mrb[0].mxu0 %v1013
    %v1514 = vpop.f32.mrb[0].mxu0
    %v1515 = vadd.f32 %v1091, %v1514
    %v1516 = vpop.f32.mrb[0].mxu0
    %1517 = vmatprep.mubr.f32.mxu0 0.0
    %1518 = vmatmul.mubr.f32.gmra.mrb[0].mxu0 %v1014
    %v1519 = vpop.f32.mrb[0].mxu0
    %v1520 = vadd.f32 %v1091, %v1519
    %v1521 = vpop.f32.mrb[0].mxu0
    %1522 = vmatprep.mubr.f32.mxu0 0.0
    %1523 = vmatmul.mubr.f32.gmra.mrb[0].mxu0 %v1015
    %v1524 = vpop.f32.mrb[0].mxu0
    %v1525 = vadd.f32 %v1091, %v1524
    %v1526 = vpop.f32.mrb[0].mxu0
    %1527 = vmatprep.mubr.f32.mxu0 0.0
    %1528 = vmatmul.mubr.f32.gmra.mrb[0].mxu0 %v1016
    %v1529 = vpop.f32.mrb[0].mxu0
    %v1530 = vadd.f32 %v1091, %v1529
    %v1531 = vpop.f32.mrb[0].mxu0
    %1532 = vmatprep.mubr.f32.mxu0 0.0
    %1533 = vmatmul.mubr.f32.gmra.mrb[0].mxu0 %v1017
    %v1534 = vpop.f32.mrb[0].mxu0
    %v1535 = vadd.f32 %v1091, %v1534
    %v1536 = vpop.f32.mrb[0].mxu0
    %1537 = vmatprep.mubr.f32.mxu0 0.0
    %1538 = vmatmul.mubr.f32.gmra.mrb[0].mxu0 %v1018
    %v1539 = vpop.f32.mrb[0].mxu0
    %v1540 = vadd.f32 %v1091, %v1539
    %v1541 = vpop.f32.mrb[0].mxu0
    %1542 = vmatprep.mubr.f32.mxu0 0.0
    %1543 = vmatmul.mubr.f32.gmra.mrb[0].mxu0 %v1019
    %v1544 = vpop.f32.mrb[0].mxu0
    %v1545 = vadd.f32 %v1091, %v1544
    %v1546 = vpop.f32.mrb[0].mxu0
    %1547 = vmatprep.mubr.f32.mxu0 0.0
    %1548 = vmatmul.mubr.f32.gmra.mrb[0].mxu0 %v1020
    %v1549 = vpop.f32.mrb[0].mxu0
    %v1550 = vadd.f32 %v1091, %v1549
    %v1551 = vpop.f32.mrb[0].mxu0
    %1552 = vmatprep.mubr.f32.mxu0 0.0
    %1553 = vmatmul.mubr.f32.gmra.mrb[0].mxu0 %v1021
    %v1554 = vpop.f32.mrb[0].mxu0
    %v1555 = vadd.f32 %v1091, %v1554
    %v1556 = vpop.f32.mrb[0].mxu0
    %1557 = vmatprep.mubr.f32.mxu0 0.0
    %1558 = vmatmul.mubr.f32.gmra.mrb[0].mxu0 %v1022
    %v1559 = vpop.f32.mrb[0].mxu0
    %v1560 = vadd.f32 %v1091, %v1559
    %v1561 = vpop.f32.mrb[0].mxu0
    %1562 = vmatprep.mubr.f32.mxu0 0.0
    %1563 = vmatmul.mubr.f32.gmra.mrb[0].mxu0 %v1023
    %v1564 = vpop.f32.mrb[0].mxu0
    %v1565 = vadd.f32 %v1091, %v1564
    %v1566 = vpop.f32.mrb[0].mxu0
    %1567 = vmatprep.mubr.f32.mxu0 0.0
    %1568 = vmatmul.mubr.f32.gmra.mrb[0].mxu0 %v1024
    %v1569 = vpop.f32.mrb[0].mxu0
    %v1570 = vadd.f32 %v1091, %v1569
    %v1571 = vpop.f32.mrb[0].mxu0
    %1572 = vmatprep.mubr.f32.mxu0 0.0
    %1573 = vmatmul.mubr.f32.gmra.mrb[0].mxu0 %v1025
    %v1574 = vpop.f32.mrb[0].mxu0
    %v1575 = vadd.f32 %v1091, %v1574
    %v1576 = vpop.f32.mrb[0].mxu0
    %1577 = vmatprep.mubr.f32.mxu0 0.0
    %1578 = vmatmul.mubr.f32.gmra.mrb[0].mxu0 %v1026
    %v1579 = vpop.f32.mrb[0].mxu0
    %v1580 = vadd.f32 %v1091, %v1579
    %v1581 = vpop.f32.mrb[0].mxu0
    %1582 = vmatprep.mubr.f32.mxu0 0.0
    %1583 = vmatmul.mubr.f32.gmra.mrb[0].mxu0 %v1027
    %v1584 = vpop.f32.mrb[0].mxu0
    %v1585 = vadd.f32 %v1091, %v1584
    %v1586 = vpop.f32.mrb[0].mxu0
    %1587 = vmatprep.mubr.f32.mxu0 0.0
    %1588 = vmatmul.mubr.f32.gmra.mrb[0].mxu0 %v1028
    %v1589 = vpop.f32.mrb[0].mxu0
    %v1590 = vadd.f32 %v1091, %v1589
    %v1591 = vpop.f32.mrb[0].mxu0
    %1592 = vmatprep.mubr.f32.mxu0 0.0
    %1593 = vmatmul.mubr.f32.gmra.mrb[0].mxu0 %v1029
    %v1594 = vpop.f32.mrb[0].mxu0
    %v1595 = vadd.f32 %v1091, %v1594
    %v1596 = vpop.f32.mrb[0].mxu0
    %1597 = vmatprep.mubr.f32.mxu0 0.0
    %1598 = vmatmul.mubr.f32.gmra.mrb[0].mxu0 %v1030
    %v1599 = vpop.f32.mrb[0].mxu0
    %v1600 = vadd.f32 %v1091, %v1599
    %v1601 = vpop.f32.mrb[0].mxu0
    %1602 = vmatprep.mubr.f32.mxu0 0.0
    %1603 = vmatmul.mubr.f32.gmra.mrb[0].mxu0 %v1031
    %v1604 = vpop.f32.mrb[0].mxu0
    %v1605 = vadd.f32 %v1091, %v1604
    %v1606 = vpop.f32.mrb[0].mxu0
    %1607 = vmatprep.mubr.f32.mxu0 0.0
    %1608 = vmatmul.mubr.f32.gmra.mrb[0].mxu0 %v1032
    %v1609 = vpop.f32.mrb[0].mxu0
    %v1610 = vadd.f32 %v1091, %v1609
    %v1611 = vpop.f32.mrb[0].mxu0
    %1612 = vmatprep.mubr.f32.mxu0 0.0
    %1613 = vmatmul.mubr.f32.gmra.mrb[0].mxu0 %v1033
    %v1614 = vpop.f32.mrb[0].mxu0
    %v1615 = vadd.f32 %v1091, %v1614
    %v1616 = vpop.f32.mrb[0].mxu0
    %1617 = vmatprep.mubr.f32.mxu0 0.0
    %1618 = vmatmul.mubr.f32.gmra.mrb[0].mxu0 %v1034
    %v1619 = vpop.f32.mrb[0].mxu0
    %v1620 = vadd.f32 %v1091, %v1619
    %v1621 = vpop.f32.mrb[0].mxu0
    %1622 = vmatprep.mubr.f32.mxu0 0.0
    %1623 = vmatmul.mubr.f32.gmra.mrb[0].mxu0 %v1035
    %v1624 = vpop.f32.mrb[0].mxu0
    %v1625 = vadd.f32 %v1091, %v1624
    %v1626 = vpop.f32.mrb[0].mxu0
    %1627 = vmatprep.mubr.f32.mxu0 0.0
    %1628 = vmatmul.mubr.f32.gmra.mrb[0].mxu0 %v1036
    %v1629 = vpop.f32.mrb[0].mxu0
    %v1630 = vadd.f32 %v1091, %v1629
    %v1631 = vpop.f32.mrb[0].mxu0
    %1632 = vmatprep.mubr.f32.mxu0 0.0
    %1633 = vmatmul.mubr.f32.gmra.mrb[0].mxu0 %v1037
    %v1634 = vpop.f32.mrb[0].mxu0
    %v1635 = vadd.f32 %v1091, %v1634
    %v1636 = vpop.f32.mrb[0].mxu0
    %1637 = vmatprep.mubr.f32.mxu0 0.0
    %1638 = vmatmul.mubr.f32.gmra.mrb[0].mxu0 %v1038
    %v1639 = vpop.f32.mrb[0].mxu0
    %v1640 = vadd.f32 %v1091, %v1639
    %v1641 = vpop.f32.mrb[0].mxu0
    %1642 = vmatprep.mubr.f32.mxu0 0.0
    %1643 = vmatmul.mubr.f32.gmra.mrb[0].mxu0 %v1039
    %v1644 = vpop.f32.mrb[0].mxu0
    %v1645 = vadd.f32 %v1091, %v1644
    %v1646 = vpop.f32.mrb[0].mxu0
    %1647 = vmatprep.mubr.f32.mxu0 0.0
    %1648 = vmatmul.mubr.f32.gmra.mrb[0].mxu0 %v1040
    %v1649 = vpop.f32.mrb[0].mxu0
    %v1650 = vadd.f32 %v1091, %v1649
    %v1651 = vpop.f32.mrb[0].mxu0
    %1652 = vmatprep.mubr.f32.mxu0 0.0
    %1653 = vmatmul.mubr.f32.gmra.mrb[0].mxu0 %v1041
    %v1654 = vpop.f32.mrb[0].mxu0
    %v1655 = vadd.f32 %v1091, %v1654
    %v1656 = vpop.f32.mrb[0].mxu0
    %1657 = vmatprep.mubr.f32.mxu0 0.0
    %1658 = vmatmul.mubr.f32.gmra.mrb[0].mxu0 %v1042
    %v1659 = vpop.f32.mrb[0].mxu0
    %v1660 = vadd.f32 %v1091, %v1659
    %v1661 = vpop.f32.mrb[0].mxu0
    %1662 = vmatprep.mubr.f32.mxu0 0.0
    %1663 = vmatmul.mubr.f32.gmra.mrb[0].mxu0 %v1043
    %v1664 = vpop.f32.mrb[0].mxu0
    %v1665 = vadd.f32 %v1091, %v1664
    %v1666 = vpop.f32.mrb[0].mxu0
    %1667 = vmatprep.mubr.f32.mxu0 0.0
    %1668 = vmatmul.mubr.f32.gmra.mrb[0].mxu0 %v1044
    %v1669 = vpop.f32.mrb[0].mxu0
    %v1670 = vadd.f32 %v1091, %v1669
    %v1671 = vpop.f32.mrb[0].mxu0
    %1672 = vmatprep.mubr.f32.mxu0 0.0
    %1673 = vmatmul.mubr.f32.gmra.mrb[0].mxu0 %v1045
    %v1674 = vpop.f32.mrb[0].mxu0
    %v1675 = vadd.f32 %v1091, %v1674
    %v1676 = vpop.f32.mrb[0].mxu0
    %1677 = vmatprep.mubr.f32.mxu0 0.0
    %1678 = vmatmul.mubr.f32.gmra.mrb[0].mxu0 %v1046
    %v1679 = vpop.f32.mrb[0].mxu0
    %v1680 = vadd.f32 %v1091, %v1679
    %v1681 = vpop.f32.mrb[0].mxu0
    %1682 = vmatprep.mubr.f32.mxu0 0.0
    %1683 = vmatmul.mubr.f32.gmra.mrb[0].mxu0 %v1047
    %v1684 = vpop.f32.mrb[0].mxu0
    %v1685 = vadd.f32 %v1091, %v1684
    %v1686 = vpop.f32.mrb[0].mxu0
    %1687 = vmatprep.mubr.f32.mxu0 0.0
    %1688 = vmatmul.mubr.f32.gmra.mrb[0].mxu0 %v1048
    %v1689 = vpop.f32.mrb[0].mxu0
    %v1690 = vadd.f32 %v1091, %v1689
    %v1691 = vpop.f32.mrb[0].mxu0
    %1692 = vmatprep.mubr.f32.mxu0 0.0
    %1693 = vmatmul.mubr.f32.gmra.mrb[0].mxu0 %v1049
    %v1694 = vpop.f32.mrb[0].mxu0
    %v1695 = vadd.f32 %v1091, %v1694
    %v1696 = vpop.f32.mrb[0].mxu0
    %1697 = vmatprep.mubr.f32.mxu0 0.0
    %1698 = vmatmul.mubr.f32.gmra.mrb[0].mxu0 %v1050
    %v1699 = vpop.f32.mrb[0].mxu0
    %v1700 = vadd.f32 %v1091, %v1699
    %v1701 = vpop.f32.mrb[0].mxu0
    %1702 = vmatprep.mubr.f32.mxu0 0.0
    %1703 = vmatmul.mubr.f32.gmra.mrb[0].mxu0 %v1051
    %v1704 = vpop.f32.mrb[0].mxu0
    %v1705 = vadd.f32 %v1091, %v1704
    %v1706 = vpop.f32.mrb[0].mxu0
    %1707 = vmatprep.mubr.f32.mxu0 0.0
    %1708 = vmatmul.mubr.f32.gmra.mrb[0].mxu0 %v1052
    %v1709 = vpop.f32.mrb[0].mxu0
    %v1710 = vadd.f32 %v1091, %v1709
    %v1711 = vpop.f32.mrb[0].mxu0
    %1712 = vmatprep.mubr.f32.mxu0 0.0
    %1713 = vmatmul.mubr.f32.gmra.mrb[0].mxu0 %v1053
    %v1714 = vpop.f32.mrb[0].mxu0
    %v1715 = vadd.f32 %v1091, %v1714
    %v1716 = vpop.f32.mrb[0].mxu0
    %1717 = vmatprep.mubr.f32.mxu0 0.0
    %1718 = vmatmul.mubr.f32.gmra.mrb[0].mxu0 %v1054
    %v1719 = vpop.f32.mrb[0].mxu0
    %v1720 = vadd.f32 %v1091, %v1719
    %v1721 = vpop.f32.mrb[0].mxu0
    %1722 = vmatprep.mubr.f32.mxu0 0.0
    %1723 = vmatmul.mubr.f32.gmra.mrb[0].mxu0 %v1055
    %v1724 = vpop.f32.mrb[0].mxu0
    %v1725 = vadd.f32 %v1091, %v1724
    %v1726 = vpop.f32.mrb[0].mxu0
    %1727 = vmatprep.mubr.f32.mxu0 0.0
    %1728 = vmatmul.mubr.f32.gmra.mrb[0].mxu0 %v1056
    %v1729 = vpop.f32.mrb[0].mxu0
    %v1730 = vadd.f32 %v1091, %v1729
    %v1731 = vpop.f32.mrb[0].mxu0
    %1732 = vmatprep.mubr.f32.mxu0 0.0
    %1733 = vmatmul.mubr.f32.gmra.mrb[0].mxu0 %v1057
    %v1734 = vpop.f32.mrb[0].mxu0
    %v1735 = vadd.f32 %v1091, %v1734
    %v1736 = vpop.f32.mrb[0].mxu0
    %1737 = vmatprep.mubr.f32.mxu0 0.0
    %1738 = vmatmul.mubr.f32.gmra.mrb[0].mxu0 %v1058
    %v1739 = vpop.f32.mrb[0].mxu0
    %v1740 = vadd.f32 %v1091, %v1739
    %v1741 = vpop.f32.mrb[0].mxu0
    %1742 = vmatprep.mubr.f32.mxu0 0.0
    %1743 = vmatmul.mubr.f32.gmra.mrb[0].mxu0 %v1059
    %v1744 = vpop.f32.mrb[0].mxu0
    %v1745 = vadd.f32 %v1091, %v1744
    %v1746 = vpop.f32.mrb[0].mxu0
    %1747 = vmatprep.mubr.f32.mxu0 0.0
    %1748 = vmatmul.mubr.f32.gmra.mrb[0].mxu0 %v1060
    %v1749 = vpop.f32.mrb[0].mxu0
    %v1750 = vadd.f32 %v1091, %v1749
    %v1751 = vpop.f32.mrb[0].mxu0
    %1752 = vmatprep.mubr.f32.mxu0 0.0
    %1753 = vmatmul.mubr.f32.gmra.mrb[0].mxu0 %v1061
    %v1754 = vpop.f32.mrb[0].mxu0
    %v1755 = vadd.f32 %v1091, %v1754
    %v1756 = vpop.f32.mrb[0].mxu0
    %1757 = vmatprep.mubr.f32.mxu0 0.0
    %1758 = vmatmul.mubr.f32.gmra.mrb[0].mxu0 %v1062
    %v1759 = vpop.f32.mrb[0].mxu0
    %v1760 = vadd.f32 %v1091, %v1759
    %v1761 = vpop.f32.mrb[0].mxu0
    %1762 = vmatprep.mubr.f32.mxu0 0.0
    %1763 = vmatmul.mubr.f32.gmra.mrb[0].mxu0 %v1063
    %v1764 = vpop.f32.mrb[0].mxu0
    %v1765 = vadd.f32 %v1091, %v1764
    %v1766 = vpop.f32.mrb[0].mxu0
    %1767 = vmatprep.mubr.f32.mxu0 0.0
    %1768 = vmatmul.mubr.f32.gmra.mrb[0].mxu0 %v1064
    %v1769 = vpop.f32.mrb[0].mxu0
    %v1770 = vadd.f32 %v1091, %v1769
    %v1771 = vpop.f32.mrb[0].mxu0
    %1772 = vmatprep.mubr.f32.mxu0 0.0
    %1773 = vmatmul.mubr.f32.gmra.mrb[0].mxu0 %v1065
    %v1774 = vpop.f32.mrb[0].mxu0
    %v1775 = vadd.f32 %v1091, %v1774
    %v1776 = vpop.f32.mrb[0].mxu0
    %1777 = vmatprep.mubr.f32.mxu0 0.0
    %1778 = vmatmul.mubr.f32.gmra.mrb[0].mxu0 %v1066
    %v1779 = vpop.f32.mrb[0].mxu0
    %v1780 = vadd.f32 %v1091, %v1779
    %v1781 = vpop.f32.mrb[0].mxu0
    %1782 = vmatprep.mubr.f32.mxu0 0.0
    %1783 = vmatmul.mubr.f32.gmra.mrb[0].mxu0 %v1067
    %v1784 = vpop.f32.mrb[0].mxu0
    %v1785 = vadd.f32 %v1091, %v1784
    %v1786 = vpop.f32.mrb[0].mxu0
    %1787 = vmatprep.mubr.f32.mxu0 0.0
    %1788 = vmatmul.mubr.f32.gmra.mrb[0].mxu0 %v1068
    %v1789 = vpop.f32.mrb[0].mxu0
    %v1790 = vadd.f32 %v1091, %v1789
    %v1791 = vpop.f32.mrb[0].mxu0
    %1792 = vmatprep.mubr.f32.mxu0 0.0
    %1793 = vmatmul.mubr.f32.gmra.mrb[0].mxu0 %v1069
    %v1794 = vpop.f32.mrb[0].mxu0
    %v1795 = vadd.f32 %v1091, %v1794
    %v1796 = vpop.f32.mrb[0].mxu0
    %1797 = vdwg.mxu0
    %v1798 = vmax.f32 %v1160, 0.0
    %v1799 = vmax.f32 %v1165, 0.0
    %v1800 = vmax.f32 %v1170, 0.0
    %v1801 = vmax.f32 %v1175, 0.0
    %v1802 = vmax.f32 %v1180, 0.0
    %v1803 = vmax.f32 %v1185, 0.0
    %v1804 = vmax.f32 %v1190, 0.0
    %v1805 = vmax.f32 %v1195, 0.0
    %v1806 = vmax.f32 %v1200, 0.0
    %v1807 = vmax.f32 %v1205, 0.0
    %v1808 = vmax.f32 %v1210, 0.0
    %v1809 = vmax.f32 %v1215, 0.0
    %v1810 = vmax.f32 %v1220, 0.0
    %v1811 = vmax.f32 %v1225, 0.0
    %v1812 = vmax.f32 %v1230, 0.0
    %v1813 = vmax.f32 %v1235, 0.0
    %v1814 = vmax.f32 %v1240, 0.0
    %v1815 = vmax.f32 %v1245, 0.0
    %v1816 = vmax.f32 %v1250, 0.0
    %v1817 = vmax.f32 %v1255, 0.0
    %v1818 = vmax.f32 %v1260, 0.0
    %v1819 = vmax.f32 %v1265, 0.0
    %v1820 = vmax.f32 %v1270, 0.0
    %v1821 = vmax.f32 %v1275, 0.0
    %v1822 = vmax.f32 %v1280, 0.0
    %v1823 = vmax.f32 %v1285, 0.0
    %v1824 = vmax.f32 %v1290, 0.0
    %v1825 = vmax.f32 %v1295, 0.0
    %v1826 = vmax.f32 %v1300, 0.0
    %v1827 = vmax.f32 %v1305, 0.0
    %v1828 = vmax.f32 %v1310, 0.0
    %v1829 = vmax.f32 %v1315, 0.0
    %v1830 = vmax.f32 %v1320, 0.0
    %v1831 = vmax.f32 %v1325, 0.0
    %v1832 = vmax.f32 %v1330, 0.0
    %v1833 = vmax.f32 %v1335, 0.0
    %v1834 = vmax.f32 %v1340, 0.0
    %v1835 = vmax.f32 %v1345, 0.0
    %v1836 = vmax.f32 %v1350, 0.0
    %v1837 = vmax.f32 %v1355, 0.0
    %v1838 = vmax.f32 %v1360, 0.0
    %v1839 = vmax.f32 %v1365, 0.0
    %v1840 = vmax.f32 %v1370, 0.0
    %v1841 = vmax.f32 %v1375, 0.0
    %v1842 = vmax.f32 %v1380, 0.0
    %v1843 = vmax.f32 %v1385, 0.0
    %v1844 = vmax.f32 %v1390, 0.0
    %v1845 = vmax.f32 %v1395, 0.0
    %v1846 = vmax.f32 %v1400, 0.0
    %v1847 = vmax.f32 %v1405, 0.0
    %v1848 = vmax.f32 %v1410, 0.0
    %v1849 = vmax.f32 %v1415, 0.0
    %v1850 = vmax.f32 %v1420, 0.0
    %v1851 = vmax.f32 %v1425, 0.0
    %v1852 = vmax.f32 %v1430, 0.0
    %v1853 = vmax.f32 %v1435, 0.0
    %v1854 = vmax.f32 %v1440, 0.0
    %v1855 = vmax.f32 %v1445, 0.0
    %v1856 = vmax.f32 %v1450, 0.0
    %v1857 = vmax.f32 %v1455, 0.0
    %v1858 = vmax.f32 %v1460, 0.0
    %v1859 = vmax.f32 %v1465, 0.0
    %v1860 = vmax.f32 %v1470, 0.0
    %v1861 = vmax.f32 %v1475, 0.0
    %v1862 = vmax.f32 %v1480, 0.0
    %v1863 = vmax.f32 %v1485, 0.0
    %v1864 = vmax.f32 %v1490, 0.0
    %v1865 = vmax.f32 %v1495, 0.0
    %v1866 = vmax.f32 %v1500, 0.0
    %v1867 = vmax.f32 %v1505, 0.0
    %v1868 = vmax.f32 %v1510, 0.0
    %v1869 = vmax.f32 %v1515, 0.0
    %v1870 = vmax.f32 %v1520, 0.0
    %v1871 = vmax.f32 %v1525, 0.0
    %v1872 = vmax.f32 %v1530, 0.0
    %v1873 = vmax.f32 %v1535, 0.0
    %v1874 = vmax.f32 %v1540, 0.0
    %v1875 = vmax.f32 %v1545, 0.0
    %v1876 = vmax.f32 %v1550, 0.0
    %v1877 = vmax.f32 %v1555, 0.0
    %v1878 = vmax.f32 %v1560, 0.0
    %v1879 = vmax.f32 %v1565, 0.0
    %v1880 = vmax.f32 %v1570, 0.0
    %v1881 = vmax.f32 %v1575, 0.0
    %v1882 = vmax.f32 %v1580, 0.0
    %v1883 = vmax.f32 %v1585, 0.0
    %v1884 = vmax.f32 %v1590, 0.0
    %v1885 = vmax.f32 %v1595, 0.0
    %v1886 = vmax.f32 %v1600, 0.0
    %v1887 = vmax.f32 %v1605, 0.0
    %v1888 = vmax.f32 %v1610, 0.0
    %v1889 = vmax.f32 %v1615, 0.0
    %v1890 = vmax.f32 %v1620, 0.0
    %v1891 = vmax.f32 %v1625, 0.0
    %v1892 = vmax.f32 %v1630, 0.0
    %v1893 = vmax.f32 %v1635, 0.0
    %v1894 = vmax.f32 %v1640, 0.0
    %v1895 = vmax.f32 %v1645, 0.0
    %v1896 = vmax.f32 %v1650, 0.0
    %v1897 = vmax.f32 %v1655, 0.0
    %v1898 = vmax.f32 %v1660, 0.0
    %v1899 = vmax.f32 %v1665, 0.0
    %v1900 = vmax.f32 %v1670, 0.0
    %v1901 = vmax.f32 %v1675, 0.0
    %v1902 = vmax.f32 %v1680, 0.0
    %v1903 = vmax.f32 %v1685, 0.0
    %v1904 = vmax.f32 %v1690, 0.0
    %v1905 = vmax.f32 %v1695, 0.0
    %v1906 = vmax.f32 %v1700, 0.0
    %v1907 = vmax.f32 %v1705, 0.0
    %v1908 = vmax.f32 %v1710, 0.0
    %v1909 = vmax.f32 %v1715, 0.0
    %v1910 = vmax.f32 %v1720, 0.0
    %v1911 = vmax.f32 %v1725, 0.0
    %v1912 = vmax.f32 %v1730, 0.0
    %v1913 = vmax.f32 %v1735, 0.0
    %v1914 = vmax.f32 %v1740, 0.0
    %v1915 = vmax.f32 %v1745, 0.0
    %v1916 = vmax.f32 %v1750, 0.0
    %v1917 = vmax.f32 %v1755, 0.0
    %v1918 = vmax.f32 %v1760, 0.0
    %v1919 = vmax.f32 %v1765, 0.0
    %v1920 = vmax.f32 %v1770, 0.0
    %v1921 = vmax.f32 %v1775, 0.0
    %v1922 = vmax.f32 %v1780, 0.0
    %v1923 = vmax.f32 %v1785, 0.0
    %v1924 = vmax.f32 %v1790, 0.0
    %v1925 = vmax.f32 %v1795, 0.0
    %s1926 = smul.u32 0, 8
    %v1927 = vstv %s1926
    %v1928 = vadd.s32 %v1927, 1
    %v1929 = vadd.s32 %v1927, 2
    %v1930 = vadd.s32 %v1927, 3
    %v1931 = vadd.s32 %v1927, 4
    %v1932 = vadd.s32 %v1927, 5
    %v1933 = vadd.s32 %v1927, 6
    %v1934 = vadd.s32 %v1927, 7
    %vm1935 = vcmp.lt.s32.totalorder %v1927, 8
    %vm1936 = vcmp.lt.s32.totalorder %v1928, 8
    %vm1937 = vcmp.lt.s32.totalorder %v1929, 8
    %vm1938 = vcmp.lt.s32.totalorder %v1930, 8
    %vm1939 = vcmp.lt.s32.totalorder %v1931, 8
    %vm1940 = vcmp.lt.s32.totalorder %v1932, 8
    %vm1941 = vcmp.lt.s32.totalorder %v1933, 8
    %vm1942 = vcmp.lt.s32.totalorder %v1934, 8
    %v1943 = vsel %vm1935, 1, 0
    %v1944 = vsel %vm1936, 1, 0
    %v1945 = vsel %vm1937, 1, 0
    %v1946 = vsel %vm1938, 1, 0
    %v1947 = vsel %vm1939, 1, 0
    %v1948 = vsel %vm1940, 1, 0
    %v1949 = vsel %vm1941, 1, 0
    %v1950 = vsel %vm1942, 1, 0
    %v1951 = vcvt.s32.f32 %v1943
    %v1952 = vcvt.s32.f32 %v1944
    %v1953 = vcvt.s32.f32 %v1945
    %v1954 = vcvt.s32.f32 %v1946
    %v1955 = vcvt.s32.f32 %v1947
    %v1956 = vcvt.s32.f32 %v1948
    %v1957 = vcvt.s32.f32 %v1949
    %v1958 = vcvt.s32.f32 %v1950
    %v1959 = vld [vmem:[#allocation2] sm:$0xff]
    %v1960 = vld [vmem:[#allocation2 + $0x8] sm:$0xff]
    %v1961 = vld [vmem:[#allocation2 + $0x10] sm:$0xff]
    %v1962 = vld [vmem:[#allocation2 + $0x18] sm:$0xff]
    %v1963 = vld [vmem:[#allocation2 + $0x20] sm:$0xff]
    %v1964 = vld [vmem:[#allocation2 + $0x28] sm:$0xff]
    %v1965 = vld [vmem:[#allocation2 + $0x30] sm:$0xff]
    %v1966 = vld [vmem:[#allocation2 + $0x38] sm:$0xff]
    %v1967 = vld [vmem:[#allocation2 + $0x40] sm:$0xff]
    %v1968 = vld [vmem:[#allocation2 + $0x48] sm:$0xff]
    %v1969 = vld [vmem:[#allocation2 + $0x50] sm:$0xff]
    %v1970 = vld [vmem:[#allocation2 + $0x58] sm:$0xff]
    %v1971 = vld [vmem:[#allocation2 + $0x60] sm:$0xff]
    %v1972 = vld [vmem:[#allocation2 + $0x68] sm:$0xff]
    %v1973 = vld [vmem:[#allocation2 + $0x70] sm:$0xff]
    %v1974 = vld [vmem:[#allocation2 + $0x78] sm:$0xff]
    %v1975 = vmul.f32 %v1798, %v1951
    %v1976 = vmul.f32 %v1799, %v1951
    %v1977 = vmul.f32 %v1800, %v1951
    %v1978 = vmul.f32 %v1801, %v1951
    %v1979 = vmul.f32 %v1802, %v1951
    %v1980 = vmul.f32 %v1803, %v1951
    %v1981 = vmul.f32 %v1804, %v1951
    %v1982 = vmul.f32 %v1805, %v1951
    %v1983 = vmul.f32 %v1806, %v1951
    %v1984 = vmul.f32 %v1807, %v1951
    %v1985 = vmul.f32 %v1808, %v1951
    %v1986 = vmul.f32 %v1809, %v1951
    %v1987 = vmul.f32 %v1810, %v1951
    %v1988 = vmul.f32 %v1811, %v1951
    %v1989 = vmul.f32 %v1812, %v1951
    %v1990 = vmul.f32 %v1813, %v1951
    %v1991 = vmul.f32 %v1814, %v1952
    %v1992 = vmul.f32 %v1815, %v1952
    %v1993 = vmul.f32 %v1816, %v1952
    %v1994 = vmul.f32 %v1817, %v1952
    %v1995 = vmul.f32 %v1818, %v1952
    %v1996 = vmul.f32 %v1819, %v1952
    %v1997 = vmul.f32 %v1820, %v1952
    %v1998 = vmul.f32 %v1821, %v1952
    %v1999 = vmul.f32 %v1822, %v1952
    %v2000 = vmul.f32 %v1823, %v1952
    %v2001 = vmul.f32 %v1824, %v1952
    %v2002 = vmul.f32 %v1825, %v1952
    %v2003 = vmul.f32 %v1826, %v1952
    %v2004 = vmul.f32 %v1827, %v1952
    %v2005 = vmul.f32 %v1828, %v1952
    %v2006 = vmul.f32 %v1829, %v1952
    %v2007 = vmul.f32 %v1830, %v1953
    %v2008 = vmul.f32 %v1831, %v1953
    %v2009 = vmul.f32 %v1832, %v1953
    %v2010 = vmul.f32 %v1833, %v1953
    %v2011 = vmul.f32 %v1834, %v1953
    %v2012 = vmul.f32 %v1835, %v1953
    %v2013 = vmul.f32 %v1836, %v1953
    %v2014 = vmul.f32 %v1837, %v1953
    %v2015 = vmul.f32 %v1838, %v1953
    %v2016 = vmul.f32 %v1839, %v1953
    %v2017 = vmul.f32 %v1840, %v1953
    %v2018 = vmul.f32 %v1841, %v1953
    %v2019 = vmul.f32 %v1842, %v1953
    %v2020 = vmul.f32 %v1843, %v1953
    %v2021 = vmul.f32 %v1844, %v1953
    %v2022 = vmul.f32 %v1845, %v1953
    %v2023 = vmul.f32 %v1846, %v1954
    %v2024 = vmul.f32 %v1847, %v1954
    %v2025 = vmul.f32 %v1848, %v1954
    %v2026 = vmul.f32 %v1849, %v1954
    %v2027 = vmul.f32 %v1850, %v1954
    %v2028 = vmul.f32 %v1851, %v1954
    %v2029 = vmul.f32 %v1852, %v1954
    %v2030 = vmul.f32 %v1853, %v1954
    %v2031 = vmul.f32 %v1854, %v1954
    %v2032 = vmul.f32 %v1855, %v1954
    %v2033 = vmul.f32 %v1856, %v1954
    %v2034 = vmul.f32 %v1857, %v1954
    %v2035 = vmul.f32 %v1858, %v1954
    %v2036 = vmul.f32 %v1859, %v1954
    %v2037 = vmul.f32 %v1860, %v1954
    %v2038 = vmul.f32 %v1861, %v1954
    %v2039 = vmul.f32 %v1862, %v1955
    %v2040 = vmul.f32 %v1863, %v1955
    %v2041 = vmul.f32 %v1864, %v1955
    %v2042 = vmul.f32 %v1865, %v1955
    %v2043 = vmul.f32 %v1866, %v1955
    %v2044 = vmul.f32 %v1867, %v1955
    %v2045 = vmul.f32 %v1868, %v1955
    %v2046 = vmul.f32 %v1869, %v1955
    %v2047 = vmul.f32 %v1870, %v1955
    %v2048 = vmul.f32 %v1871, %v1955
    %v2049 = vmul.f32 %v1872, %v1955
    %v2050 = vmul.f32 %v1873, %v1955
    %v2051 = vmul.f32 %v1874, %v1955
    %v2052 = vmul.f32 %v1875, %v1955
    %v2053 = vmul.f32 %v1876, %v1955
    %v2054 = vmul.f32 %v1877, %v1955
    %v2055 = vmul.f32 %v1878, %v1956
    %v2056 = vmul.f32 %v1879, %v1956
    %v2057 = vmul.f32 %v1880, %v1956
    %v2058 = vmul.f32 %v1881, %v1956
    %v2059 = vmul.f32 %v1882, %v1956
    %v2060 = vmul.f32 %v1883, %v1956
    %v2061 = vmul.f32 %v1884, %v1956
    %v2062 = vmul.f32 %v1885, %v1956
    %v2063 = vmul.f32 %v1886, %v1956
    %v2064 = vmul.f32 %v1887, %v1956
    %v2065 = vmul.f32 %v1888, %v1956
    %v2066 = vmul.f32 %v1889, %v1956
    %v2067 = vmul.f32 %v1890, %v1956
    %v2068 = vmul.f32 %v1891, %v1956
    %v2069 = vmul.f32 %v1892, %v1956
    %v2070 = vmul.f32 %v1893, %v1956
    %v2071 = vmul.f32 %v1894, %v1957
    %v2072 = vmul.f32 %v1895, %v1957
    %v2073 = vmul.f32 %v1896, %v1957
    %v2074 = vmul.f32 %v1897, %v1957
    %v2075 = vmul.f32 %v1898, %v1957
    %v2076 = vmul.f32 %v1899, %v1957
    %v2077 = vmul.f32 %v1900, %v1957
    %v2078 = vmul.f32 %v1901, %v1957
    %v2079 = vmul.f32 %v1902, %v1957
    %v2080 = vmul.f32 %v1903, %v1957
    %v2081 = vmul.f32 %v1904, %v1957
    %v2082 = vmul.f32 %v1905, %v1957
    %v2083 = vmul.f32 %v1906, %v1957
    %v2084 = vmul.f32 %v1907, %v1957
    %v2085 = vmul.f32 %v1908, %v1957
    %v2086 = vmul.f32 %v1909, %v1957
    %v2087 = vmul.f32 %v1910, %v1958
    %v2088 = vmul.f32 %v1911, %v1958
    %v2089 = vmul.f32 %v1912, %v1958
    %v2090 = vmul.f32 %v1913, %v1958
    %v2091 = vmul.f32 %v1914, %v1958
    %v2092 = vmul.f32 %v1915, %v1958
    %v2093 = vmul.f32 %v1916, %v1958
    %v2094 = vmul.f32 %v1917, %v1958
    %v2095 = vmul.f32 %v1918, %v1958
    %v2096 = vmul.f32 %v1919, %v1958
    %v2097 = vmul.f32 %v1920, %v1958
    %v2098 = vmul.f32 %v1921, %v1958
    %v2099 = vmul.f32 %v1922, %v1958
    %v2100 = vmul.f32 %v1923, %v1958
    %v2101 = vmul.f32 %v1924, %v1958
    %v2102 = vmul.f32 %v1925, %v1958
    %v2103 = vadd.f32 %v1975, %v1991
    %v2104 = vadd.f32 %v2103, %v2007
    %v2105 = vadd.f32 %v2104, %v2023
    %v2106 = vadd.f32 %v2105, %v2039
    %v2107 = vadd.f32 %v2106, %v2055
    %v2108 = vadd.f32 %v2107, %v2071
    %v2109 = vadd.f32 %v2108, %v2087
    %v2110 = vadd.f32 %v1976, %v1992
    %v2111 = vadd.f32 %v2110, %v2008
    %v2112 = vadd.f32 %v2111, %v2024
    %v2113 = vadd.f32 %v2112, %v2040
    %v2114 = vadd.f32 %v2113, %v2056
    %v2115 = vadd.f32 %v2114, %v2072
    %v2116 = vadd.f32 %v2115, %v2088
    %v2117 = vadd.f32 %v1977, %v1993
    %v2118 = vadd.f32 %v2117, %v2009
    %v2119 = vadd.f32 %v2118, %v2025
    %v2120 = vadd.f32 %v2119, %v2041
    %v2121 = vadd.f32 %v2120, %v2057
    %v2122 = vadd.f32 %v2121, %v2073
    %v2123 = vadd.f32 %v2122, %v2089
    %v2124 = vadd.f32 %v1978, %v1994
    %v2125 = vadd.f32 %v2124, %v2010
    %v2126 = vadd.f32 %v2125, %v2026
    %v2127 = vadd.f32 %v2126, %v2042
    %v2128 = vadd.f32 %v2127, %v2058
    %v2129 = vadd.f32 %v2128, %v2074
    %v2130 = vadd.f32 %v2129, %v2090
    %v2131 = vadd.f32 %v1979, %v1995
    %v2132 = vadd.f32 %v2131, %v2011
    %v2133 = vadd.f32 %v2132, %v2027
    %v2134 = vadd.f32 %v2133, %v2043
    %v2135 = vadd.f32 %v2134, %v2059
    %v2136 = vadd.f32 %v2135, %v2075
    %v2137 = vadd.f32 %v2136, %v2091
    %v2138 = vadd.f32 %v1980, %v1996
    %v2139 = vadd.f32 %v2138, %v2012
    %v2140 = vadd.f32 %v2139, %v2028
    %v2141 = vadd.f32 %v2140, %v2044
    %v2142 = vadd.f32 %v2141, %v2060
    %v2143 = vadd.f32 %v2142, %v2076
    %v2144 = vadd.f32 %v2143, %v2092
    %v2145 = vadd.f32 %v1981, %v1997
    %v2146 = vadd.f32 %v2145, %v2013
    %v2147 = vadd.f32 %v2146, %v2029
    %v2148 = vadd.f32 %v2147, %v2045
    %v2149 = vadd.f32 %v2148, %v2061
    %v2150 = vadd.f32 %v2149, %v2077
    %v2151 = vadd.f32 %v2150, %v2093
    %v2152 = vadd.f32 %v1982, %v1998
    %v2153 = vadd.f32 %v2152, %v2014
    %v2154 = vadd.f32 %v2153, %v2030
    %v2155 = vadd.f32 %v2154, %v2046
    %v2156 = vadd.f32 %v2155, %v2062
    %v2157 = vadd.f32 %v2156, %v2078
    %v2158 = vadd.f32 %v2157, %v2094
    %v2159 = vadd.f32 %v1983, %v1999
    %v2160 = vadd.f32 %v2159, %v2015
    %v2161 = vadd.f32 %v2160, %v2031
    %v2162 = vadd.f32 %v2161, %v2047
    %v2163 = vadd.f32 %v2162, %v2063
    %v2164 = vadd.f32 %v2163, %v2079
    %v2165 = vadd.f32 %v2164, %v2095
    %v2166 = vadd.f32 %v1984, %v2000
    %v2167 = vadd.f32 %v2166, %v2016
    %v2168 = vadd.f32 %v2167, %v2032
    %v2169 = vadd.f32 %v2168, %v2048
    %v2170 = vadd.f32 %v2169, %v2064
    %v2171 = vadd.f32 %v2170, %v2080
    %v2172 = vadd.f32 %v2171, %v2096
    %v2173 = vadd.f32 %v1985, %v2001
    %v2174 = vadd.f32 %v2173, %v2017
    %v2175 = vadd.f32 %v2174, %v2033
    %v2176 = vadd.f32 %v2175, %v2049
    %v2177 = vadd.f32 %v2176, %v2065
    %v2178 = vadd.f32 %v2177, %v2081
    %v2179 = vadd.f32 %v2178, %v2097
    %v2180 = vadd.f32 %v1986, %v2002
    %v2181 = vadd.f32 %v2180, %v2018
    %v2182 = vadd.f32 %v2181, %v2034
    %v2183 = vadd.f32 %v2182, %v2050
    %v2184 = vadd.f32 %v2183, %v2066
    %v2185 = vadd.f32 %v2184, %v2082
    %v2186 = vadd.f32 %v2185, %v2098
    %v2187 = vadd.f32 %v1987, %v2003
    %v2188 = vadd.f32 %v2187, %v2019
    %v2189 = vadd.f32 %v2188, %v2035
    %v2190 = vadd.f32 %v2189, %v2051
    %v2191 = vadd.f32 %v2190, %v2067
    %v2192 = vadd.f32 %v2191, %v2083
    %v2193 = vadd.f32 %v2192, %v2099
    %v2194 = vadd.f32 %v1988, %v2004
    %v2195 = vadd.f32 %v2194, %v2020
    %v2196 = vadd.f32 %v2195, %v2036
    %v2197 = vadd.f32 %v2196, %v2052
    %v2198 = vadd.f32 %v2197, %v2068
    %v2199 = vadd.f32 %v2198, %v2084
    %v2200 = vadd.f32 %v2199, %v2100
    %v2201 = vadd.f32 %v1989, %v2005
    %v2202 = vadd.f32 %v2201, %v2021
    %v2203 = vadd.f32 %v2202, %v2037
    %v2204 = vadd.f32 %v2203, %v2053
    %v2205 = vadd.f32 %v2204, %v2069
    %v2206 = vadd.f32 %v2205, %v2085
    %v2207 = vadd.f32 %v2206, %v2101
    %v2208 = vadd.f32 %v1990, %v2006
    %v2209 = vadd.f32 %v2208, %v2022
    %v2210 = vadd.f32 %v2209, %v2038
    %v2211 = vadd.f32 %v2210, %v2054
    %v2212 = vadd.f32 %v2211, %v2070
    %v2213 = vadd.f32 %v2212, %v2086
    %v2214 = vadd.f32 %v2213, %v2102
    %v2215 = vadd.f32 %v1959, %v2109
    %v2216 = vadd.f32 %v1960, %v2116
    %v2217 = vadd.f32 %v1961, %v2123
    %v2218 = vadd.f32 %v1962, %v2130
    %v2219 = vadd.f32 %v1963, %v2137
    %v2220 = vadd.f32 %v1964, %v2144
    %v2221 = vadd.f32 %v1965, %v2151
    %v2222 = vadd.f32 %v1966, %v2158
    %v2223 = vadd.f32 %v1967, %v2165
    %v2224 = vadd.f32 %v1968, %v2172
    %v2225 = vadd.f32 %v1969, %v2179
    %v2226 = vadd.f32 %v1970, %v2186
    %v2227 = vadd.f32 %v1971, %v2193
    %v2228 = vadd.f32 %v1972, %v2200
    %v2229 = vadd.f32 %v1973, %v2207
    %v2230 = vadd.f32 %v1974, %v2214
    %2231 = vst [vmem:[#allocation2] sm:$0xff] %v2215
    %2232 = vst [vmem:[#allocation2 + $0x8] sm:$0xff] %v2216
    %2233 = vst [vmem:[#allocation2 + $0x10] sm:$0xff] %v2217
    %2234 = vst [vmem:[#allocation2 + $0x18] sm:$0xff] %v2218
    %2235 = vst [vmem:[#allocation2 + $0x20] sm:$0xff] %v2219
    %2236 = vst [vmem:[#allocation2 + $0x28] sm:$0xff] %v2220
    %2237 = vst [vmem:[#allocation2 + $0x30] sm:$0xff] %v2221
    %2238 = vst [vmem:[#allocation2 + $0x38] sm:$0xff] %v2222
    %2239 = vst [vmem:[#allocation2 + $0x40] sm:$0xff] %v2223
    %2240 = vst [vmem:[#allocation2 + $0x48] sm:$0xff] %v2224
    %2241 = vst [vmem:[#allocation2 + $0x50] sm:$0xff] %v2225
    %2242 = vst [vmem:[#allocation2 + $0x58] sm:$0xff] %v2226
    %2243 = vst [vmem:[#allocation2 + $0x60] sm:$0xff] %v2227
    %2244 = vst [vmem:[#allocation2 + $0x68] sm:$0xff] %v2228
    %2245 = vst [vmem:[#allocation2 + $0x70] sm:$0xff] %v2229
    %2246 = vst [vmem:[#allocation2 + $0x78] sm:$0xff] %v2230
    // Predicated region
    $region62: #{tpu_custom_call.1} parent=1 // pred_check
      %p2247 = pneg %p115
    $region63: #{tpu_custom_call.1} parent=1 // pred_check_branch
      %2249 = sbr.rel (%p2247) target = $region65
    $region64: #{tpu_custom_call.1} parent=1 // pred_region
      %v2250 = vld [vmem:[#allocation2] sm:$0xff]
      %v2251 = vld [vmem:[#allocation2 + $0x8] sm:$0xff]
      %v2252 = vld [vmem:[#allocation2 + $0x10] sm:$0xff]
      %v2253 = vld [vmem:[#allocation2 + $0x18] sm:$0xff]
      %v2254 = vld [vmem:[#allocation2 + $0x20] sm:$0xff]
      %v2255 = vld [vmem:[#allocation2 + $0x28] sm:$0xff]
      %v2256 = vld [vmem:[#allocation2 + $0x30] sm:$0xff]
      %v2257 = vld [vmem:[#allocation2 + $0x38] sm:$0xff]
      %v2258 = vld [vmem:[#allocation2 + $0x40] sm:$0xff]
      %v2259 = vld [vmem:[#allocation2 + $0x48] sm:$0xff]
      %v2260 = vld [vmem:[#allocation2 + $0x50] sm:$0xff]
      %v2261 = vld [vmem:[#allocation2 + $0x58] sm:$0xff]
      %v2262 = vld [vmem:[#allocation2 + $0x60] sm:$0xff]
      %v2263 = vld [vmem:[#allocation2 + $0x68] sm:$0xff]
      %v2264 = vld [vmem:[#allocation2 + $0x70] sm:$0xff]
      %v2265 = vld [vmem:[#allocation2 + $0x78] sm:$0xff]
      %v2266 = vmul.f32 %v2250, 0.125
      %v2267 = vmul.f32 %v2251, 0.125
      %v2268 = vmul.f32 %v2252, 0.125
      %v2269 = vmul.f32 %v2253, 0.125
      %v2270 = vmul.f32 %v2254, 0.125
      %v2271 = vmul.f32 %v2255, 0.125
      %v2272 = vmul.f32 %v2256, 0.125
      %v2273 = vmul.f32 %v2257, 0.125
      %v2274 = vmul.f32 %v2258, 0.125
      %v2275 = vmul.f32 %v2259, 0.125
      %v2276 = vmul.f32 %v2260, 0.125
      %v2277 = vmul.f32 %v2261, 0.125
      %v2278 = vmul.f32 %v2262, 0.125
      %v2279 = vmul.f32 %v2263, 0.125
      %v2280 = vmul.f32 %v2264, 0.125
      %v2281 = vmul.f32 %v2265, 0.125
      %v2282 = vld [vmem:[#allocation12] sm:$0xff]
      %v2283 = vld [vmem:[#allocation12 + $0x8] sm:$0xff]
      %v2284 = vld [vmem:[#allocation12 + $0x10] sm:$0xff]
      %v2285 = vld [vmem:[#allocation12 + $0x18] sm:$0xff]
      %v2286 = vld [vmem:[#allocation12 + $0x20] sm:$0xff]
      %v2287 = vld [vmem:[#allocation12 + $0x28] sm:$0xff]
      %v2288 = vld [vmem:[#allocation12 + $0x30] sm:$0xff]
      %v2289 = vld [vmem:[#allocation12 + $0x38] sm:$0xff]
      %v2290 = vld [vmem:[#allocation12 + $0x40] sm:$0xff]
      %v2291 = vld [vmem:[#allocation12 + $0x48] sm:$0xff]
      %v2292 = vld [vmem:[#allocation12 + $0x50] sm:$0xff]
      %v2293 = vld [vmem:[#allocation12 + $0x58] sm:$0xff]
      %v2294 = vld [vmem:[#allocation12 + $0x60] sm:$0xff]
      %v2295 = vld [vmem:[#allocation12 + $0x68] sm:$0xff]
      %v2296 = vld [vmem:[#allocation12 + $0x70] sm:$0xff]
      %v2297 = vld [vmem:[#allocation12 + $0x78] sm:$0xff]
      %v2298 = vld [vmem:[#allocation12 + $0x80] sm:$0xff]
      %v2299 = vld [vmem:[#allocation12 + $0x88] sm:$0xff]
      %v2300 = vld [vmem:[#allocation12 + $0x90] sm:$0xff]
      %v2301 = vld [vmem:[#allocation12 + $0x98] sm:$0xff]
      %v2302 = vld [vmem:[#allocation12 + $0xa0] sm:$0xff]
      %v2303 = vld [vmem:[#allocation12 + $0xa8] sm:$0xff]
      %v2304 = vld [vmem:[#allocation12 + $0xb0] sm:$0xff]
      %v2305 = vld [vmem:[#allocation12 + $0xb8] sm:$0xff]
      %v2306 = vld [vmem:[#allocation12 + $0xc0] sm:$0xff]
      %v2307 = vld [vmem:[#allocation12 + $0xc8] sm:$0xff]
      %v2308 = vld [vmem:[#allocation12 + $0xd0] sm:$0xff]
      %v2309 = vld [vmem:[#allocation12 + $0xd8] sm:$0xff]
      %v2310 = vld [vmem:[#allocation12 + $0xe0] sm:$0xff]
      %v2311 = vld [vmem:[#allocation12 + $0xe8] sm:$0xff]
      %v2312 = vld [vmem:[#allocation12 + $0xf0] sm:$0xff]
      %v2313 = vld [vmem:[#allocation12 + $0xf8] sm:$0xff]
      %2314 = vmatprep.subr.mxu0 %v2283
      %2315 = vmatpush1.msra.mxu0 %v2282
      %2316 = vmatprep.subr.mxu0 %v2285
      %2317 = vmatpush1.msra.mxu0 %v2284
      %2318 = vmatprep.subr.mxu0 %v2287
      %2319 = vmatpush1.msra.mxu0 %v2286
      %2320 = vmatprep.subr.mxu0 %v2289
      %2321 = vmatpush1.msra.mxu0 %v2288
      %2322 = vmatprep.subr.mxu0 %v2291
      %2323 = vmatpush1.msra.mxu0 %v2290
      %2324 = vmatprep.subr.mxu0 %v2293
      %2325 = vmatpush1.msra.mxu0 %v2292
      %2326 = vmatprep.subr.mxu0 %v2295
      %2327 = vmatpush1.msra.mxu0 %v2294
      %2328 = vmatprep.subr.mxu0 %v2297
      %2329 = vmatpush1.msra.mxu0 %v2296
      %2330 = vmatprep.subr.mxu0 %v2299
      %2331 = vmatpush1.msra.mxu0 %v2298
      %2332 = vmatprep.subr.mxu0 %v2301
      %2333 = vmatpush1.msra.mxu0 %v2300
      %2334 = vmatprep.subr.mxu0 %v2303
      %2335 = vmatpush1.msra.mxu0 %v2302
      %2336 = vmatprep.subr.mxu0 %v2305
      %2337 = vmatpush1.msra.mxu0 %v2304
      %2338 = vmatprep.subr.mxu0 %v2307
      %2339 = vmatpush1.msra.mxu0 %v2306
      %2340 = vmatprep.subr.mxu0 %v2309
      %2341 = vmatpush1.msra.mxu0 %v2308
      %2342 = vmatprep.subr.mxu0 %v2311
      %2343 = vmatpush1.msra.mxu0 %v2310
      %2344 = vmatprep.subr.mxu0 %v2313
      %2345 = vmatpush1.msra.mxu0 %v2312
      %2346 = vmatprep.subr.mxu0 0.0
      %2347 = vmatpush1.msra.mxu0 0.0
      %2348 = vmatprep.subr.mxu0 0.0
      %2349 = vmatpush1.msra.mxu0 0.0
      %2350 = vmatprep.subr.mxu0 0.0
      %2351 = vmatpush1.msra.mxu0 0.0
      %2352 = vmatprep.subr.mxu0 0.0
      %2353 = vmatpush1.msra.mxu0 0.0
      %2354 = vmatprep.subr.mxu0 0.0
      %2355 = vmatpush1.msra.mxu0 0.0
      %2356 = vmatprep.subr.mxu0 0.0
      %2357 = vmatpush1.msra.mxu0 0.0
      %2358 = vmatprep.subr.mxu0 0.0
      %2359 = vmatpush1.msra.mxu0 0.0
      %2360 = vmatprep.subr.mxu0 0.0
      %2361 = vmatpush1.msra.mxu0 0.0
      %2362 = vmatprep.subr.mxu0 0.0
      %2363 = vmatpush1.msra.mxu0 0.0
      %2364 = vmatprep.subr.mxu0 0.0
      %2365 = vmatpush1.msra.mxu0 0.0
      %2366 = vmatprep.subr.mxu0 0.0
      %2367 = vmatpush1.msra.mxu0 0.0
      %2368 = vmatprep.subr.mxu0 0.0
      %2369 = vmatpush1.msra.mxu0 0.0
      %2370 = vmatprep.subr.mxu0 0.0
      %2371 = vmatpush1.msra.mxu0 0.0
      %2372 = vmatprep.subr.mxu0 0.0
      %2373 = vmatpush1.msra.mxu0 0.0
      %2374 = vmatprep.subr.mxu0 0.0
      %2375 = vmatpush1.msra.mxu0 0.0
      %2376 = vmatprep.subr.mxu0 0.0
      %2377 = vmatpush1.msra.mxu0 0.0
      %2378 = vmatprep.mubr.f32.mxu0 0.0
      %2379 = vmatmul.mubr.f32.gmra.mrb[0].mxu0 %v2266
      %v2380 = vpop.f32.mrb[0].mxu0
      %v2381 = vadd.f32 0.0, %v2380
      %v2382 = vpop.f32.mrb[0].mxu0
      %v2383 = vadd.f32 0.0, %v2382
      %2384 = vmatprep.mubr.f32.mxu0 0.0
      %2385 = vmatmul.mubr.f32.gmra.mrb[0].mxu0 %v2267
      %v2386 = vpop.f32.mrb[0].mxu0
      %v2387 = vadd.f32 0.0, %v2386
      %v2388 = vpop.f32.mrb[0].mxu0
      %v2389 = vadd.f32 0.0, %v2388
      %2390 = vmatprep.mubr.f32.mxu0 0.0
      %2391 = vmatmul.mubr.f32.gmra.mrb[0].mxu0 %v2268
      %v2392 = vpop.f32.mrb[0].mxu0
      %v2393 = vadd.f32 0.0, %v2392
      %v2394 = vpop.f32.mrb[0].mxu0
      %v2395 = vadd.f32 0.0, %v2394
      %2396 = vmatprep.mubr.f32.mxu0 0.0
      %2397 = vmatmul.mubr.f32.gmra.mrb[0].mxu0 %v2269
      %v2398 = vpop.f32.mrb[0].mxu0
      %v2399 = vadd.f32 0.0, %v2398
      %v2400 = vpop.f32.mrb[0].mxu0
      %v2401 = vadd.f32 0.0, %v2400
      %2402 = vmatprep.mubr.f32.mxu0 0.0
      %2403 = vmatmul.mubr.f32.gmra.mrb[0].mxu0 %v2270
      %v2404 = vpop.f32.mrb[0].mxu0
      %v2405 = vadd.f32 0.0, %v2404
      %v2406 = vpop.f32.mrb[0].mxu0
      %v2407 = vadd.f32 0.0, %v2406
      %2408 = vmatprep.mubr.f32.mxu0 0.0
      %2409 = vmatmul.mubr.f32.gmra.mrb[0].mxu0 %v2271
      %v2410 = vpop.f32.mrb[0].mxu0
      %v2411 = vadd.f32 0.0, %v2410
      %v2412 = vpop.f32.mrb[0].mxu0
      %v2413 = vadd.f32 0.0, %v2412
      %2414 = vmatprep.mubr.f32.mxu0 0.0
      %2415 = vmatmul.mubr.f32.gmra.mrb[0].mxu0 %v2272
      %v2416 = vpop.f32.mrb[0].mxu0
      %v2417 = vadd.f32 0.0, %v2416
      %v2418 = vpop.f32.mrb[0].mxu0
      %v2419 = vadd.f32 0.0, %v2418
      %2420 = vmatprep.mubr.f32.mxu0 0.0
      %2421 = vmatmul.mubr.f32.gmra.mrb[0].mxu0 %v2273
      %v2422 = vpop.f32.mrb[0].mxu0
      %v2423 = vadd.f32 0.0, %v2422
      %v2424 = vpop.f32.mrb[0].mxu0
      %v2425 = vadd.f32 0.0, %v2424
      %2426 = vmatprep.mubr.f32.mxu0 0.0
      %2427 = vmatmul.mubr.f32.gmra.mrb[0].mxu0 %v2274
      %v2428 = vpop.f32.mrb[0].mxu0
      %v2429 = vadd.f32 0.0, %v2428
      %v2430 = vpop.f32.mrb[0].mxu0
      %v2431 = vadd.f32 0.0, %v2430
      %2432 = vmatprep.mubr.f32.mxu0 0.0
      %2433 = vmatmul.mubr.f32.gmra.mrb[0].mxu0 %v2275
      %v2434 = vpop.f32.mrb[0].mxu0
      %v2435 = vadd.f32 0.0, %v2434
      %v2436 = vpop.f32.mrb[0].mxu0
      %v2437 = vadd.f32 0.0, %v2436
      %2438 = vmatprep.mubr.f32.mxu0 0.0
      %2439 = vmatmul.mubr.f32.gmra.mrb[0].mxu0 %v2276
      %v2440 = vpop.f32.mrb[0].mxu0
      %v2441 = vadd.f32 0.0, %v2440
      %v2442 = vpop.f32.mrb[0].mxu0
      %v2443 = vadd.f32 0.0, %v2442
      %2444 = vmatprep.mubr.f32.mxu0 0.0
      %2445 = vmatmul.mubr.f32.gmra.mrb[0].mxu0 %v2277
      %v2446 = vpop.f32.mrb[0].mxu0
      %v2447 = vadd.f32 0.0, %v2446
      %v2448 = vpop.f32.mrb[0].mxu0
      %v2449 = vadd.f32 0.0, %v2448
      %2450 = vmatprep.mubr.f32.mxu0 0.0
      %2451 = vmatmul.mubr.f32.gmra.mrb[0].mxu0 %v2278
      %v2452 = vpop.f32.mrb[0].mxu0
      %v2453 = vadd.f32 0.0, %v2452
      %v2454 = vpop.f32.mrb[0].mxu0
      %v2455 = vadd.f32 0.0, %v2454
      %2456 = vmatprep.mubr.f32.mxu0 0.0
      %2457 = vmatmul.mubr.f32.gmra.mrb[0].mxu0 %v2279
      %v2458 = vpop.f32.mrb[0].mxu0
      %v2459 = vadd.f32 0.0, %v2458
      %v2460 = vpop.f32.mrb[0].mxu0
      %v2461 = vadd.f32 0.0, %v2460
      %2462 = vmatprep.mubr.f32.mxu0 0.0
      %2463 = vmatmul.mubr.f32.gmra.mrb[0].mxu0 %v2280
      %v2464 = vpop.f32.mrb[0].mxu0
      %v2465 = vadd.f32 0.0, %v2464
      %v2466 = vpop.f32.mrb[0].mxu0
      %v2467 = vadd.f32 0.0, %v2466
      %2468 = vmatprep.mubr.f32.mxu0 0.0
      %2469 = vmatmul.mubr.f32.gmra.mrb[0].mxu0 %v2281
      %v2470 = vpop.f32.mrb[0].mxu0
      %v2471 = vadd.f32 0.0, %v2470
      %v2472 = vpop.f32.mrb[0].mxu0
      %v2473 = vadd.f32 0.0, %v2472
      %2474 = vdwg.mxu0
      %v2475 = vld [vmem:[#allocation14] sm:$0x1]
      %v2477 = vlaneseq
      %v2478 = vshrl.u32 %v2477, 7
      %v2479 = vsub.s32 0, %v2478
      %v2480 = vrot.slane %v2475, %v2479
      %v2482 = vadd.f32 %v2381, %v2480
      %v2483 = vadd.f32 %v2387, %v2480
      %v2484 = vadd.f32 %v2393, %v2480
      %v2485 = vadd.f32 %v2399, %v2480
      %v2486 = vadd.f32 %v2405, %v2480
      %v2487 = vadd.f32 %v2411, %v2480
      %v2488 = vadd.f32 %v2417, %v2480
      %v2489 = vadd.f32 %v2423, %v2480
      %v2490 = vadd.f32 %v2429, %v2480
      %v2491 = vadd.f32 %v2435, %v2480
      %v2492 = vadd.f32 %v2441, %v2480
      %v2493 = vadd.f32 %v2447, %v2480
      %v2494 = vadd.f32 %v2453, %v2480
      %v2495 = vadd.f32 %v2459, %v2480
      %v2496 = vadd.f32 %v2465, %v2480
      %v2497 = vadd.f32 %v2471, %v2480
      %2498 = vst [vmem:[#allocation15] sm:$0xff] %v2482
      %2499 = vst [vmem:[#allocation15 + $0x8] sm:$0xff] %v2483
      %2500 = vst [vmem:[#allocation15 + $0x10] sm:$0xff] %v2484
      %2501 = vst [vmem:[#allocation15 + $0x18] sm:$0xff] %v2485
      %2502 = vst [vmem:[#allocation15 + $0x20] sm:$0xff] %v2486
      %2503 = vst [vmem:[#allocation15 + $0x28] sm:$0xff] %v2487
      %2504 = vst [vmem:[#allocation15 + $0x30] sm:$0xff] %v2488
      %2505 = vst [vmem:[#allocation15 + $0x38] sm:$0xff] %v2489
      %2506 = vst [vmem:[#allocation15 + $0x40] sm:$0xff] %v2490
      %2507 = vst [vmem:[#allocation15 + $0x48] sm:$0xff] %v2491
      %2508 = vst [vmem:[#allocation15 + $0x50] sm:$0xff] %v2492
      %2509 = vst [vmem:[#allocation15 + $0x58] sm:$0xff] %v2493
      %2510 = vst [vmem:[#allocation15 + $0x60] sm:$0xff] %v2494
      %2511 = vst [vmem:[#allocation15 + $0x68] sm:$0xff] %v2495
      %2512 = vst [vmem:[#allocation15 + $0x70] sm:$0xff] %v2496
      %2513 = vst [vmem:[#allocation15 + $0x78] sm:$0xff] %v2497
      %2514 = vst [vmem:[#allocation16] sm:$0xff] %v2383
      %2515 = vst [vmem:[#allocation16 + $0x8] sm:$0xff] %v2389
      %2516 = vst [vmem:[#allocation16 + $0x10] sm:$0xff] %v2395
      %2517 = vst [vmem:[#allocation16 + $0x18] sm:$0xff] %v2401
      %2518 = vst [vmem:[#allocation16 + $0x20] sm:$0xff] %v2407
      %2519 = vst [vmem:[#allocation16 + $0x28] sm:$0xff] %v2413
      %2520 = vst [vmem:[#allocation16 + $0x30] sm:$0xff] %v2419
      %2521 = vst [vmem:[#allocation16 + $0x38] sm:$0xff] %v2425
      %2522 = vst [vmem:[#allocation16 + $0x40] sm:$0xff] %v2431
      %2523 = vst [vmem:[#allocation16 + $0x48] sm:$0xff] %v2437
      %2524 = vst [vmem:[#allocation16 + $0x50] sm:$0xff] %v2443
      %2525 = vst [vmem:[#allocation16 + $0x58] sm:$0xff] %v2449
      %2526 = vst [vmem:[#allocation16 + $0x60] sm:$0xff] %v2455
      %2527 = vst [vmem:[#allocation16 + $0x68] sm:$0xff] %v2461
      %2528 = vst [vmem:[#allocation16 + $0x70] sm:$0xff] %v2467
      %2529 = vst [vmem:[#allocation16 + $0x78] sm:$0xff] %v2473
    $region65: #{tpu_custom_call.1} parent=1 // pred_fallthru
      _
    // Predicated region
    $region66: #{tpu_custom_call.1} parent=1 // pred_check
      _
    $region67: #{tpu_custom_call.1} parent=1 // pred_check_branch
      %2531 = sbr.rel (0) target = $region69
    $region68: #{tpu_custom_call.1} parent=1 // pred_region
      %s2533 = ssub.s32 2048, 2048
      %2534 = vsyncadd [#allocation5], %s2533
      %s2535 = sshll.u32 [#allocation15], 4
      %s2536 = int_to_ptr.vmem [resolvable:$true] %s2535
      %2541 = dma.vmem_to_hbm [thread:$0]  %s2536, 2048, %s7, [#allocation5], 128, 128, 8
    $region69: #{tpu_custom_call.1} parent=1 // pred_fallthru
      _
    // Predicated region
    $region70: #{tpu_custom_call.1} parent=1 // pred_check
      _
    $region71: #{tpu_custom_call.1} parent=1 // pred_check_branch
      %2543 = sbr.rel (0) target = $region73
    $region72: #{tpu_custom_call.1} parent=1 // pred_region
      %s2545 = ssub.s32 2048, 2048
      %2546 = vsyncadd [#allocation17], %s2545
      %s2547 = sshll.u32 [#allocation16], 4
      %s2548 = int_to_ptr.vmem [resolvable:$true] %s2547
      %2553 = dma.vmem_to_hbm [thread:$0]  %s2548, 2048, %s8, [#allocation17], 128, 128, 8
    $region73: #{tpu_custom_call.1} parent=1 // pred_fallthru
      _
    // Predicated region
    $region74: #{tpu_custom_call.1} parent=1 // pred_check
      _
    $region75: #{tpu_custom_call.1} parent=1 // pred_check_branch
      %2555 = sbr.rel (0) target = $region77
    $region76: #{tpu_custom_call.1} parent=1 // pred_region
      %2556 = dma.done [#allocation5], 2048
    $region77: #{tpu_custom_call.1} parent=1 // pred_fallthru
      _
    // Predicated region
    $region78: #{tpu_custom_call.1} parent=1 // pred_check
      _
    $region79: #{tpu_custom_call.1} parent=1 // pred_check_branch
      %2558 = sbr.rel (0) target = $region81
    $region80: #{tpu_custom_call.1} parent=1 // pred_region
      %2559 = dma.done [#allocation17], 2048
    $region81: #{tpu_custom_call.1} parent=1 // pred_fallthru
      _
    %2560 = vsyncpa [#allocation4], 1
    %2561 = vsyncpa [#allocation7], 1
    %2562 = vsyncpa [#allocation10], 1
    %2563 = vsyncpa [#allocation13], 1
    %2564 = vsyncpa [#allocation5], 1
    %2565 = vsyncpa [#allocation17], 1

</llo_original>
